<compile_context>
chip_gen: v6e
topology: v6e:2x2x1
jax: 0.10.0
libtpu: 0.0.40
codegen_flags: <defaults>
</compile_context>

<pallas_src>
import functools
import math

import jax
import jax.numpy as jnp
import numpy as np
from jax import lax
from jax.experimental import pallas as pl
from jax.experimental.pallas import tpu as pltpu

EPS = 1e-6


def _layernorm(x, a, b, d):
    # matches torch: a * (x - mean) / (std + eps) + b with unbiased std (N-1)
    # and eps added to std.  The divide goes through the EUP (approx recip).
    mean = jnp.mean(x, axis=-1, keepdims=True)
    var = jnp.sum((x - mean) ** 2, axis=-1, keepdims=True) * (1.0 / (d - 1))
    inv = pl.reciprocal(jnp.sqrt(var) + EPS, approx=True)
    return a * (x - mean) * inv + b


def transformer_block_kernel(
    # inputs
    x_q_ref, x_kv_ref, mask_ref,
    ln1_a_ref, ln1_b_ref,
    wq_ref, bq_ref, wk_ref, bk_ref, wv_ref, bv_ref, wo_ref, bo_ref,
    ln2_a_ref, ln2_b_ref,
    w1_ref, b1_ref, w2_ref, b2_ref,
    # outputs
    out_ref,
    # scratch
    q_scr, k_scr, v_scr, attn_scr,
    *, num_heads, exp_bf16):
    f32 = jnp.float32
    bf16 = jnp.bfloat16

    tq, d = x_q_ref.shape
    dk = d // num_heads
    scale = 1.0 / math.sqrt(dk)

    ln1_a = ln1_a_ref[...]
    ln1_b = ln1_b_ref[...]

    # ---- K/V cache: the full-row LayerNorm and the K/V projections depend
    # only on the batch row, so compute them once per row (the query-tile grid
    # axis is "arbitrary" -> sequential per core) and cache them in VMEM.
    @pl.when(pl.program_id(1) == 0)
    def _():
        x_kv = x_kv_ref[...].astype(f32)                        # (T, D)
        xkv_n = _layernorm(x_kv, ln1_a, ln1_b, d).astype(bf16)
        k = jnp.dot(xkv_n, wk_ref[...], preferred_element_type=f32) + bk_ref[...]
        v = jnp.dot(xkv_n, wv_ref[...], preferred_element_type=f32) + bv_ref[...]
        k_scr[...] = k.astype(bf16)
        v_scr[...] = v.astype(bf16)

    # ---- sublayer 0: x + self_attn(LayerNorm(x), mask) ----------------------
    x_q = x_q_ref[...].astype(f32)                              # (TQ, D)
    xq_n = _layernorm(x_q, ln1_a, ln1_b, d)
    q = jnp.dot(xq_n.astype(bf16), wq_ref[...], preferred_element_type=f32) + bq_ref[...]
    q_scr[...] = (q * scale).astype(bf16)        # fold 1/sqrt(dk) into Q once

    # hoisted additive mask bias (computed once, reused by every head)
    neg = jnp.where(mask_ref[...] == 0.0, -1e9, 0.0)            # (1, T)

    # Per-head attention.  Each head writes its (TQ, dk) output slice into a
    # bf16 VMEM scratch (scratch-concat, no f32 accumulator carried across the
    # unrolled loop), and Wo is applied once after the loop with a full-D MXU
    # contraction.
    # TODO(synk): pack 2-4 heads per dot_general (head-major staging, dk padded
    # to 128 lanes) to fill the 256-wide MXU contraction on v6e/v7x when dk<128.
    for h in range(num_heads):                    # static offsets per head
        lo = h * dk
        qh = q_scr[:, lo:lo + dk]
        kh = k_scr[:, lo:lo + dk]
        vh = v_scr[:, lo:lo + dk]
        # contract on dk directly -> no materialized transpose of K
        s = lax.dot_general(qh, kh, (((1,), (1,)), ((), ())),
                            preferred_element_type=f32)         # (TQ, T)
        s = s + neg
        s = s - jnp.max(s, axis=-1, keepdims=True)              # f32 max-subtract
        if exp_bf16:
            e = jnp.exp(s.astype(bf16)).astype(f32)             # bf16 EUP (v6e/v7x)
        else:
            e = jnp.exp(s)                                      # f32 (v5e: no bf16 EUP)
        p = e * pl.reciprocal(jnp.sum(e, axis=-1, keepdims=True), approx=True)
        oh = jnp.dot(p.astype(bf16), vh, preferred_element_type=f32)   # (TQ, dk)
        attn_scr[:, lo:lo + dk] = oh.astype(bf16)

    attn = jnp.dot(attn_scr[...], wo_ref[...], preferred_element_type=f32)
    x1 = x_q + attn + bo_ref[...]                # dropout == identity (eval / p=0)

    # ---- sublayer 1: x1 + FFN(LayerNorm(x1)) --------------------------------
    xn2 = _layernorm(x1, ln2_a_ref[...], ln2_b_ref[...], d)
    h1 = jnp.maximum(
        jnp.dot(xn2.astype(bf16), w1_ref[...], preferred_element_type=f32)
        + b1_ref[...], 0.0)
    ff = jnp.dot(h1.astype(bf16), w2_ref[...], preferred_element_type=f32) + b2_ref[...]
    out_ref[...] = (x1 + ff).astype(out_ref.dtype)


# ------------------------- one-time cached device probes ---------------------
@functools.lru_cache(maxsize=None)
def _device_vmem_bytes():
    """Physical VMEM per TensorCore (falls back to the 64 MiB v7x minimum)."""
    try:
        return int(pltpu.get_tpu_info().vmem_capacity_bytes)
    except Exception:
        return 64 << 20


@functools.lru_cache(maxsize=None)
def _use_bf16_exp():
    """bf16 EUP exp only on v6e / v7x (v5e has no bf16 EUP)."""
    try:
        kind = jax.devices()[0].device_kind.lower()
    except Exception:
        return False
    return ("v6" in kind) or ("v7" in kind)


@functools.lru_cache(maxsize=None)
def _single_buffer_weights_supported():
    """One-time probe (cached, outside the hot path): does this jax/Mosaic
    version support per-operand single buffering (pl.Buffered(1))?  The probe
    is a trivial copy kernel, so catching its failure cannot mask a real error
    in the transformer kernel itself."""
    def _copy(x_ref, o_ref):
        o_ref[...] = x_ref[...]
    try:
        probe = pl.pallas_call(
            _copy,
            out_shape=jax.ShapeDtypeStruct((8, 128), jnp.float32),
            grid=(2,),
            in_specs=[pl.BlockSpec((8, 128), lambda i: (0, 0),
                                   pipeline_mode=pl.Buffered(1))],
            out_specs=pl.BlockSpec((8, 128), lambda i: (0, 0)))
        jax.jit(probe).lower(jax.ShapeDtypeStruct((8, 128), jnp.float32)).compile()
        return True
    except Exception:
        return False


# ------------------------------- call builder --------------------------------
def _build_call(B, T, D, d_ff, tq, num_heads, out_dtype, exp_bf16,
                single_buffer_weights, vmem_limit):
    nq = T // tq
    kernel = functools.partial(transformer_block_kernel,
                               num_heads=num_heads, exp_bf16=exp_bf16)

    def const_spec(shape):
        # Weight/bias blocks have a constant block index: single-buffer them
        # (when supported) so the pipeline does not hold 2x VMEM for operands
        # that never change across the grid.
        if single_buffer_weights:
            return pl.BlockSpec(shape, lambda b, i: (0,) * len(shape),
                                pipeline_mode=pl.Buffered(1))
        return pl.BlockSpec(shape, lambda b, i: (0,) * len(shape))

    in_specs = [
        pl.BlockSpec((None, tq, D), lambda b, i: (b, i, 0)),   # x: query tile (f32)
        pl.BlockSpec((None, T, D), lambda b, i: (b, 0, 0)),    # x: full row, bf16 (K/V)
        pl.BlockSpec((None, 1, T), lambda b, i: (b, 0, 0)),    # mask
        const_spec((1, D)), const_spec((1, D)),                # ln1 a, b
        const_spec((D, D)), const_spec((1, D)),                # Wq, bq
        const_spec((D, D)), const_spec((1, D)),                # Wk, bk
        const_spec((D, D)), const_spec((1, D)),                # Wv, bv
        const_spec((D, D)), const_spec((1, D)),                # Wo, bo
        const_spec((1, D)), const_spec((1, D)),                # ln2 a, b
        const_spec((D, d_ff)), const_spec((1, d_ff)),          # W1, b1
        const_spec((d_ff, D)), const_spec((1, D)),             # W2, b2
    ]
    out_spec = pl.BlockSpec((None, tq, D), lambda b, i: (b, i, 0))

    scratch_shapes = [
        pltpu.VMEM((tq, D), jnp.bfloat16),   # Q (scaled), staged per tile
        pltpu.VMEM((T, D), jnp.bfloat16),    # K cache (per batch row)
        pltpu.VMEM((T, D), jnp.bfloat16),    # V cache (per batch row)
        pltpu.VMEM((tq, D), jnp.bfloat16),   # concatenated head outputs
    ]

    return pl.pallas_call(
        kernel,
        out_shape=jax.ShapeDtypeStruct((B, T, D), out_dtype),
        grid=(B, nq),
        in_specs=in_specs,
        out_specs=out_spec,
        scratch_shapes=scratch_shapes,
        compiler_params=pltpu.CompilerParams(
            # batch is megacore-parallel; the query-tile axis must stay
            # "arbitrary" so the K/V scratch is valid across tiles of a row.
            dimension_semantics=("parallel", "arbitrary"),
            vmem_limit_bytes=int(vmem_limit)),
    )


@functools.partial(
    jax.jit,
    static_argnames=("num_heads", "tq", "exp_bf16", "single_buffer_weights",
                     "vmem_limit"))
def _transformer_block_jit(x, mask, params, *, num_heads, tq, exp_bf16,
                           single_buffer_weights, vmem_limit):
    B, T, D = x.shape
    d_ff = params["w1"].shape[1]
    bf16 = jnp.bfloat16
    call = _build_call(B, T, D, d_ff, tq, num_heads, x.dtype, exp_bf16,
                       single_buffer_weights, vmem_limit)
    return call(
        x, x.astype(bf16), mask,
        params["ln1_a"], params["ln1_b"],
        params["wq"].astype(bf16), params["bq"],
        params["wk"].astype(bf16), params["bk"],
        params["wv"].astype(bf16), params["bv"],
        params["wo"].astype(bf16), params["bo"],
        params["ln2_a"], params["ln2_b"],
        params["w1"].astype(bf16), params["b1"],
        params["w2"].astype(bf16), params["b2"],
    )


def _default_tq(T, vmem_cap_bytes):
    # v7x (64 MiB VMEM/TC) -> 128-row query tiles; v5e/v6e (128 MiB) -> 256.
    base = 128 if vmem_cap_bytes <= (64 << 20) else 256
    if T <= base:
        return T
    for cand in range(base, 7, -8):          # multiple of 8 that divides T
        if T % cand == 0:
            return cand
    return T


def transformer_block(x, mask, params, *, num_heads, tq=None):
    """Eager front-end: resolves device-dependent static configuration once
    (cached probes), then dispatches the jitted Pallas kernel.  No host sync
    here, so consecutive layers / steps can overlap."""
    B, T, D = x.shape
    d_ff = params["w1"].shape[1]
    assert D % num_heads == 0
    vmem_cap = _device_vmem_bytes()
    if tq is None:
        tq = _default_tq(T, vmem_cap)
    assert T % tq == 0

    single_buffer = _single_buffer_weights_supported()
    exp_bf16 = _use_bf16_exp()

    # VMEM budget estimate, clamped to physical capacity minus headroom.
    w_bytes = 2 * (4 * D * D + 2 * D * d_ff) + 4 * (9 * D + d_ff)
    if not single_buffer:
        w_bytes *= 2                                       # default double buffering
    act_bytes = (2 * (8 * tq * D + 2 * T * D + 4 * T)      # pipelined in/out blocks
                 + 2 * (2 * T * D + 2 * tq * D)            # Q/K/V/attn scratch (bf16)
                 + 4 * (tq * T + tq * d_ff + 3 * T * D))   # in-kernel temporaries
    est = w_bytes + act_bytes + (8 << 20)
    vmem_limit = int(min(max(est, 32 << 20), vmem_cap - (8 << 20)))

    return _transformer_block_jit(
        x, mask, params,
        num_heads=int(num_heads), tq=int(tq), exp_bf16=bool(exp_bf16),
        single_buffer_weights=bool(single_buffer), vmem_limit=vmem_limit)


# ------------------------- pure-JAX f32 reference (sanity check) -------------
def _ref_forward(x, mask, params, num_heads):
    B, T, D = x.shape
    dk = D // num_heads

    def ln(z, a, b):
        mean = jnp.mean(z, axis=-1, keepdims=True)
        var = jnp.sum((z - mean) ** 2, axis=-1, keepdims=True) / (D - 1)
        return a * (z - mean) / (jnp.sqrt(var) + EPS) + b

    xn = ln(x, params["ln1_a"], params["ln1_b"])
    q = xn @ params["wq"] + params["bq"]
    k = xn @ params["wk"] + params["bk"]
    v = xn @ params["wv"] + params["bv"]
    q = q.reshape(B, T, num_heads, dk).transpose(0, 2, 1, 3)
    k = k.reshape(B, T, num_heads, dk).transpose(0, 2, 1, 3)
    v = v.reshape(B, T, num_heads, dk).transpose(0, 2, 1, 3)
    s = jnp.einsum("bhqd,bhkd->bhqk", q, k) / math.sqrt(dk)
    s = jnp.where(mask[:, None, :, :] == 0, -1e9, s)
    p = jax.nn.softmax(s, axis=-1)
    o = jnp.einsum("bhqk,bhkd->bhqd", p, v).transpose(0, 2, 1, 3).reshape(B, T, D)
    x1 = x + (o @ params["wo"] + params["bo"])
    xn2 = ln(x1, params["ln2_a"], params["ln2_b"])
    ff = jnp.maximum(xn2 @ params["w1"] + params["b1"], 0.0) @ params["w2"] + params["b2"]
    return x1 + ff


if __name__ == "__main__":
    B, T, D, H, DFF, TQ = 2, 16, 32, 4, 64, 8   # TQ < T exercises the K/V cache

    key = jax.random.PRNGKey(0)
    ks = jax.random.split(key, 16)

    def init(k, shape, scale=0.1):
        return (scale * jax.random.normal(k, shape)).astype(jnp.float32)

    params = {
        "ln1_a": jnp.ones((1, D), jnp.float32),
        "ln1_b": jnp.zeros((1, D), jnp.float32),
        "ln2_a": jnp.ones((1, D), jnp.float32),
        "ln2_b": jnp.zeros((1, D), jnp.float32),
        "wq": init(ks[0], (D, D)),    "bq": init(ks[1], (1, D)),
        "wk": init(ks[2], (D, D)),    "bk": init(ks[3], (1, D)),
        "wv": init(ks[4], (D, D)),    "bv": init(ks[5], (1, D)),
        "wo": init(ks[6], (D, D)),    "bo": init(ks[7], (1, D)),
        "w1": init(ks[8], (D, DFF)),  "b1": init(ks[9], (1, DFF)),
        "w2": init(ks[10], (DFF, D)), "b2": init(ks[11], (1, D)),
    }

    x = jax.random.normal(ks[12], (B, T, D), jnp.float32)
    # mask: 1 = attend, 0 = masked; mask the last 3 key positions of batch 1
    mask = jnp.ones((B, 1, T), jnp.float32).at[1, 0, T - 3:].set(0.0)

    out = transformer_block(x, mask, params, num_heads=H, tq=TQ)
    out = jax.block_until_ready(out)

    ref = _ref_forward(x, mask, params, H)
    # bf16 matmul operands / kv activations + approx reciprocals -> loose tol
    np.testing.assert_allclose(np.asarray(out), np.asarray(ref), rtol=2e-2, atol=2e-2)

    print("KERNEL_OK")
</pallas_src>

<mosaic_0001>
module attributes {stable_mosaic.version = 11 : i64} {
  func.func @transformer_block_kernel(%arg0: i32, %arg1: i32, %arg2: memref<1x8x32xf32, #tpu.memory_space<vmem>>, %arg3: memref<1x16x32xbf16, #tpu.memory_space<vmem>>, %arg4: memref<1x1x16xf32, #tpu.memory_space<vmem>>, %arg5: memref<1x32xf32, #tpu.memory_space<vmem>>, %arg6: memref<1x32xf32, #tpu.memory_space<vmem>>, %arg7: memref<32x32xbf16, #tpu.memory_space<vmem>>, %arg8: memref<1x32xf32, #tpu.memory_space<vmem>>, %arg9: memref<32x32xbf16, #tpu.memory_space<vmem>>, %arg10: memref<1x32xf32, #tpu.memory_space<vmem>>, %arg11: memref<32x32xbf16, #tpu.memory_space<vmem>>, %arg12: memref<1x32xf32, #tpu.memory_space<vmem>>, %arg13: memref<32x32xbf16, #tpu.memory_space<vmem>>, %arg14: memref<1x32xf32, #tpu.memory_space<vmem>>, %arg15: memref<1x32xf32, #tpu.memory_space<vmem>>, %arg16: memref<1x32xf32, #tpu.memory_space<vmem>>, %arg17: memref<32x64xbf16, #tpu.memory_space<vmem>>, %arg18: memref<1x64xf32, #tpu.memory_space<vmem>>, %arg19: memref<64x32xbf16, #tpu.memory_space<vmem>>, %arg20: memref<1x32xf32, #tpu.memory_space<vmem>>, %arg21: memref<1x8x32xf32, #tpu.memory_space<vmem>>, %arg22: memref<8x32xbf16, #tpu.memory_space<vmem>>, %arg23: memref<16x32xbf16, #tpu.memory_space<vmem>>, %arg24: memref<16x32xbf16, #tpu.memory_space<vmem>>, %arg25: memref<8x32xbf16, #tpu.memory_space<vmem>>) attributes {dimension_semantics = [#tpu.dimension_semantics<parallel>, #tpu.dimension_semantics<arbitrary>], iteration_bounds = array<i64: 2, 2>, scalar_prefetch = 0 : i64, scratch_operands = 4 : i64, tpu.core_type = #tpu.core_type<tc>, window_params = [{transform_indices = @transform_0, window_bounds = array<i64: 1, 8, 32>}, {transform_indices = @transform_1, window_bounds = array<i64: 1, 16, 32>}, {transform_indices = @transform_2, window_bounds = array<i64: 1, 1, 16>}, {pipeline_mode = #tpu.pipeline_mode<synchronous>, transform_indices = @transform_3, window_bounds = array<i64: 1, 32>}, {pipeline_mode = #tpu.pipeline_mode<synchronous>, transform_indices = @transform_4, window_bounds = array<i64: 1, 32>}, {pipeline_mode = #tpu.pipeline_mode<synchronous>, transform_indices = @transform_5, window_bounds = array<i64: 32, 32>}, {pipeline_mode = #tpu.pipeline_mode<synchronous>, transform_indices = @transform_6, window_bounds = array<i64: 1, 32>}, {pipeline_mode = #tpu.pipeline_mode<synchronous>, transform_indices = @transform_7, window_bounds = array<i64: 32, 32>}, {pipeline_mode = #tpu.pipeline_mode<synchronous>, transform_indices = @transform_8, window_bounds = array<i64: 1, 32>}, {pipeline_mode = #tpu.pipeline_mode<synchronous>, transform_indices = @transform_9, window_bounds = array<i64: 32, 32>}, {pipeline_mode = #tpu.pipeline_mode<synchronous>, transform_indices = @transform_10, window_bounds = array<i64: 1, 32>}, {pipeline_mode = #tpu.pipeline_mode<synchronous>, transform_indices = @transform_11, window_bounds = array<i64: 32, 32>}, {pipeline_mode = #tpu.pipeline_mode<synchronous>, transform_indices = @transform_12, window_bounds = array<i64: 1, 32>}, {pipeline_mode = #tpu.pipeline_mode<synchronous>, transform_indices = @transform_13, window_bounds = array<i64: 1, 32>}, {pipeline_mode = #tpu.pipeline_mode<synchronous>, transform_indices = @transform_14, window_bounds = array<i64: 1, 32>}, {pipeline_mode = #tpu.pipeline_mode<synchronous>, transform_indices = @transform_15, window_bounds = array<i64: 32, 64>}, {pipeline_mode = #tpu.pipeline_mode<synchronous>, transform_indices = @transform_16, window_bounds = array<i64: 1, 64>}, {pipeline_mode = #tpu.pipeline_mode<synchronous>, transform_indices = @transform_17, window_bounds = array<i64: 64, 32>}, {pipeline_mode = #tpu.pipeline_mode<synchronous>, transform_indices = @transform_18, window_bounds = array<i64: 1, 32>}, {transform_indices = @transform_19, window_bounds = array<i64: 1, 8, 32>}]} {
    %c0 = arith.constant 0 : index
    %c0_0 = arith.constant 0 : index
    %0 = vector.load %arg5[%c0, %c0_0] : memref<1x32xf32, #tpu.memory_space<vmem>>, vector<1x32xf32>
    %c0_1 = arith.constant 0 : index
    %c0_2 = arith.constant 0 : index
    %1 = vector.load %arg6[%c0_1, %c0_2] : memref<1x32xf32, #tpu.memory_space<vmem>>, vector<1x32xf32>
    %c0_i32 = arith.constant 0 : i32
    %2 = arith.cmpi eq, %arg1, %c0_i32 : i32
    %3 = arith.extui %2 : i1 to i32
    %c0_i32_3 = arith.constant 0 : i32
    %4 = arith.cmpi ne, %3, %c0_i32_3 : i32
    scf.if %4 {
      %c0_100 = arith.constant 0 : index
      %c0_101 = arith.constant 0 : index
      %c0_102 = arith.constant 0 : index
      %177 = vector.load %arg3[%c0_100, %c0_101, %c0_102] : memref<1x16x32xbf16, #tpu.memory_space<vmem>>, vector<1x16x32xbf16>
      %178 = vector.shape_cast %177 : vector<1x16x32xbf16> to vector<16x32xbf16>
      %179 = arith.extf %178 : vector<16x32xbf16> to vector<16x32xf32>
      %cst_103 = arith.constant dense<0.000000e+00> : vector<16xf32>
      %180 = vector.multi_reduction <add>, %179, %cst_103 [1] : vector<16x32xf32> to vector<16xf32>
      %181 = vector.shape_cast %180 : vector<16xf32> to vector<16x1xf32>
      %cst_104 = arith.constant 3.200000e+01 : f32
      %182 = vector.broadcast %cst_104 : f32 to vector<16x1xf32>
      %183 = arith.divf %181, %182 : vector<16x1xf32>
      %184 = vector.broadcast %183 : vector<16x1xf32> to vector<16x32xf32>
      %185 = arith.subf %179, %184 : vector<16x32xf32>
      %186 = arith.mulf %185, %185 : vector<16x32xf32>
      %cst_105 = arith.constant dense<0.000000e+00> : vector<16xf32>
      %187 = vector.multi_reduction <add>, %186, %cst_105 [1] : vector<16x32xf32> to vector<16xf32>
      %188 = vector.shape_cast %187 : vector<16xf32> to vector<16x1xf32>
      %cst_106 = arith.constant 0.0322580636 : f32
      %189 = vector.broadcast %cst_106 : f32 to vector<16x1xf32>
      %190 = arith.mulf %188, %189 : vector<16x1xf32>
      %191 = math.sqrt %190 : vector<16x1xf32>
      %cst_107 = arith.constant 9.99999997E-7 : f32
      %192 = vector.broadcast %cst_107 : f32 to vector<16x1xf32>
      %193 = arith.addf %191, %192 : vector<16x1xf32>
      %194 = tpu.reciprocal %193 {approx = true} : vector<16x1xf32> -> vector<16x1xf32>
      %195 = vector.broadcast %183 : vector<16x1xf32> to vector<16x32xf32>
      %196 = arith.subf %179, %195 : vector<16x32xf32>
      %197 = vector.broadcast %0 : vector<1x32xf32> to vector<16x32xf32>
      %198 = arith.mulf %197, %196 : vector<16x32xf32>
      %199 = vector.broadcast %194 : vector<16x1xf32> to vector<16x32xf32>
      %200 = arith.mulf %198, %199 : vector<16x32xf32>
      %201 = vector.broadcast %1 : vector<1x32xf32> to vector<16x32xf32>
      %202 = arith.addf %200, %201 : vector<16x32xf32>
      %203 = arith.truncf %202 : vector<16x32xf32> to vector<16x32xbf16>
      %c0_108 = arith.constant 0 : index
      %c0_109 = arith.constant 0 : index
      %204 = vector.load %arg9[%c0_108, %c0_109] : memref<32x32xbf16, #tpu.memory_space<vmem>>, vector<32x32xbf16>
      %cst_110 = arith.constant dense<0.000000e+00> : vector<16x32xf32>
      %205 = tpu.matmul %203, %204, %cst_110 {dimension_numbers = #tpu.dot_dimension_numbers<[1], [0], [0], [1], [0, 0, 1, 1], [], []>} : vector<16x32xbf16>, vector<32x32xbf16>, vector<16x32xf32> -> vector<16x32xf32>
      %c0_111 = arith.constant 0 : index
      %c0_112 = arith.constant 0 : index
      %206 = vector.load %arg10[%c0_111, %c0_112] : memref<1x32xf32, #tpu.memory_space<vmem>>, vector<1x32xf32>
      %207 = vector.broadcast %206 : vector<1x32xf32> to vector<16x32xf32>
      %208 = arith.addf %205, %207 : vector<16x32xf32>
      %c0_113 = arith.constant 0 : index
      %c0_114 = arith.constant 0 : index
      %209 = vector.load %arg11[%c0_113, %c0_114] : memref<32x32xbf16, #tpu.memory_space<vmem>>, vector<32x32xbf16>
      %cst_115 = arith.constant dense<0.000000e+00> : vector<16x32xf32>
      %210 = tpu.matmul %203, %209, %cst_115 {dimension_numbers = #tpu.dot_dimension_numbers<[1], [0], [0], [1], [0, 0, 1, 1], [], []>} : vector<16x32xbf16>, vector<32x32xbf16>, vector<16x32xf32> -> vector<16x32xf32>
      %c0_116 = arith.constant 0 : index
      %c0_117 = arith.constant 0 : index
      %211 = vector.load %arg12[%c0_116, %c0_117] : memref<1x32xf32, #tpu.memory_space<vmem>>, vector<1x32xf32>
      %212 = vector.broadcast %211 : vector<1x32xf32> to vector<16x32xf32>
      %213 = arith.addf %210, %212 : vector<16x32xf32>
      %214 = arith.truncf %208 : vector<16x32xf32> to vector<16x32xbf16>
      %c0_118 = arith.constant 0 : index
      %c0_119 = arith.constant 0 : index
      %215 = vector.load %arg23[%c0_118, %c0_119] : memref<16x32xbf16, #tpu.memory_space<vmem>>, vector<16x32xbf16>
      tpu.vector_store %arg23[%c0_118, %c0_119], %214 {strides = array<i32>} : memref<16x32xbf16, #tpu.memory_space<vmem>>, vector<16x32xbf16>,
      %216 = arith.truncf %213 : vector<16x32xf32> to vector<16x32xbf16>
      %c0_120 = arith.constant 0 : index
      %c0_121 = arith.constant 0 : index
      %217 = vector.load %arg24[%c0_120, %c0_121] : memref<16x32xbf16, #tpu.memory_space<vmem>>, vector<16x32xbf16>
      tpu.vector_store %arg24[%c0_120, %c0_121], %216 {strides = array<i32>} : memref<16x32xbf16, #tpu.memory_space<vmem>>, vector<16x32xbf16>,
    } else {
    }
    %c0_4 = arith.constant 0 : index
    %c0_5 = arith.constant 0 : index
    %c0_6 = arith.constant 0 : index
    %5 = vector.load %arg2[%c0_4, %c0_5, %c0_6] : memref<1x8x32xf32, #tpu.memory_space<vmem>>, vector<1x8x32xf32>
    %6 = vector.shape_cast %5 : vector<1x8x32xf32> to vector<8x32xf32>
    %cst = arith.constant dense<0.000000e+00> : vector<8xf32>
    %7 = vector.multi_reduction <add>, %6, %cst [1] : vector<8x32xf32> to vector<8xf32>
    %8 = vector.shape_cast %7 : vector<8xf32> to vector<8x1xf32>
    %cst_7 = arith.constant 3.200000e+01 : f32
    %9 = vector.broadcast %cst_7 : f32 to vector<8x1xf32>
    %10 = arith.divf %8, %9 : vector<8x1xf32>
    %11 = vector.broadcast %10 : vector<8x1xf32> to vector<8x32xf32>
    %12 = arith.subf %6, %11 : vector<8x32xf32>
    %13 = arith.mulf %12, %12 : vector<8x32xf32>
    %cst_8 = arith.constant dense<0.000000e+00> : vector<8xf32>
    %14 = vector.multi_reduction <add>, %13, %cst_8 [1] : vector<8x32xf32> to vector<8xf32>
    %15 = vector.shape_cast %14 : vector<8xf32> to vector<8x1xf32>
    %cst_9 = arith.constant 0.0322580636 : f32
    %16 = vector.broadcast %cst_9 : f32 to vector<8x1xf32>
    %17 = arith.mulf %15, %16 : vector<8x1xf32>
    %18 = math.sqrt %17 : vector<8x1xf32>
    %cst_10 = arith.constant 9.99999997E-7 : f32
    %19 = vector.broadcast %cst_10 : f32 to vector<8x1xf32>
    %20 = arith.addf %18, %19 : vector<8x1xf32>
    %21 = tpu.reciprocal %20 {approx = true} : vector<8x1xf32> -> vector<8x1xf32>
    %22 = vector.broadcast %10 : vector<8x1xf32> to vector<8x32xf32>
    %23 = arith.subf %6, %22 : vector<8x32xf32>
    %24 = vector.broadcast %0 : vector<1x32xf32> to vector<8x32xf32>
    %25 = arith.mulf %24, %23 : vector<8x32xf32>
    %26 = vector.broadcast %21 : vector<8x1xf32> to vector<8x32xf32>
    %27 = arith.mulf %25, %26 : vector<8x32xf32>
    %28 = vector.broadcast %1 : vector<1x32xf32> to vector<8x32xf32>
    %29 = arith.addf %27, %28 : vector<8x32xf32>
    %30 = arith.truncf %29 : vector<8x32xf32> to vector<8x32xbf16>
    %c0_11 = arith.constant 0 : index
    %c0_12 = arith.constant 0 : index
    %31 = vector.load %arg7[%c0_11, %c0_12] : memref<32x32xbf16, #tpu.memory_space<vmem>>, vector<32x32xbf16>
    %cst_13 = arith.constant dense<0.000000e+00> : vector<8x32xf32>
    %32 = tpu.matmul %30, %31, %cst_13 {dimension_numbers = #tpu.dot_dimension_numbers<[1], [0], [0], [1], [0, 0, 1, 1], [], []>} : vector<8x32xbf16>, vector<32x32xbf16>, vector<8x32xf32> -> vector<8x32xf32>
    %c0_14 = arith.constant 0 : index
    %c0_15 = arith.constant 0 : index
    %33 = vector.load %arg8[%c0_14, %c0_15] : memref<1x32xf32, #tpu.memory_space<vmem>>, vector<1x32xf32>
    %34 = vector.broadcast %33 : vector<1x32xf32> to vector<8x32xf32>
    %35 = arith.addf %32, %34 : vector<8x32xf32>
    %cst_16 = arith.constant 0.353553385 : f32
    %36 = vector.broadcast %cst_16 : f32 to vector<8x32xf32>
    %37 = arith.mulf %35, %36 : vector<8x32xf32>
    %38 = arith.truncf %37 : vector<8x32xf32> to vector<8x32xbf16>
    %c0_17 = arith.constant 0 : index
    %c0_18 = arith.constant 0 : index
    %39 = vector.load %arg22[%c0_17, %c0_18] : memref<8x32xbf16, #tpu.memory_space<vmem>>, vector<8x32xbf16>
    tpu.vector_store %arg22[%c0_17, %c0_18], %38 {strides = array<i32>} : memref<8x32xbf16, #tpu.memory_space<vmem>>, vector<8x32xbf16>,
    %c0_19 = arith.constant 0 : index
    %c0_20 = arith.constant 0 : index
    %c0_21 = arith.constant 0 : index
    %40 = vector.load %arg4[%c0_19, %c0_20, %c0_21] : memref<1x1x16xf32, #tpu.memory_space<vmem>>, vector<1x1x16xf32>
    %41 = vector.shape_cast %40 : vector<1x1x16xf32> to vector<1x16xf32>
    %cst_22 = arith.constant 0.000000e+00 : f32
    %42 = vector.broadcast %cst_22 : f32 to vector<1x16xf32>
    %43 = arith.cmpf oeq, %41, %42 : vector<1x16xf32>
    %cst_23 = arith.constant -1.000000e+09 : f32
    %cst_24 = arith.constant 0.000000e+00 : f32
    %44 = vector.broadcast %cst_23 : f32 to vector<1x16xf32>
    %45 = vector.broadcast %cst_24 : f32 to vector<1x16xf32>
    %46 = arith.select %43, %44, %45 : vector<1x16xi1>, vector<1x16xf32>
    %c0_25 = arith.constant 0 : index
    %c0_26 = arith.constant 0 : index
    %47 = vector.load %arg22[%c0_25, %c0_26] : memref<8x32xbf16, #tpu.memory_space<vmem>>, vector<8x8xbf16>
    %c0_27 = arith.constant 0 : index
    %c0_28 = arith.constant 0 : index
    %48 = vector.load %arg23[%c0_27, %c0_28] : memref<16x32xbf16, #tpu.memory_space<vmem>>, vector<16x8xbf16>
    %c0_29 = arith.constant 0 : index
    %c0_30 = arith.constant 0 : index
    %49 = vector.load %arg24[%c0_29, %c0_30] : memref<16x32xbf16, #tpu.memory_space<vmem>>, vector<16x8xbf16>
    %cst_31 = arith.constant dense<0.000000e+00> : vector<8x16xf32>
    %50 = tpu.matmul %47, %48, %cst_31 {dimension_numbers = #tpu.dot_dimension_numbers<[1], [1], [0], [0], [0, 0, 1, 0], [], []>} : vector<8x8xbf16>, vector<16x8xbf16>, vector<8x16xf32> -> vector<8x16xf32>
    %51 = vector.broadcast %46 : vector<1x16xf32> to vector<8x16xf32>
    %52 = arith.addf %50, %51 : vector<8x16xf32>
    %cst_32 = arith.constant dense<0xFF800000> : vector<8xf32>
    %53 = vector.multi_reduction <maximumf>, %52, %cst_32 [1] : vector<8x16xf32> to vector<8xf32>
    %54 = vector.shape_cast %53 : vector<8xf32> to vector<8x1xf32>
    %55 = vector.broadcast %54 : vector<8x1xf32> to vector<8x16xf32>
    %56 = arith.subf %52, %55 : vector<8x16xf32>
    %57 = math.exp %56 : vector<8x16xf32>
    %cst_33 = arith.constant dense<0.000000e+00> : vector<8xf32>
    %58 = vector.multi_reduction <add>, %57, %cst_33 [1] : vector<8x16xf32> to vector<8xf32>
    %59 = vector.shape_cast %58 : vector<8xf32> to vector<8x1xf32>
    %60 = tpu.reciprocal %59 {approx = true} : vector<8x1xf32> -> vector<8x1xf32>
    %61 = vector.broadcast %60 : vector<8x1xf32> to vector<8x16xf32>
    %62 = arith.mulf %57, %61 : vector<8x16xf32>
    %63 = arith.truncf %62 : vector<8x16xf32> to vector<8x16xbf16>
    %cst_34 = arith.constant dense<0.000000e+00> : vector<8x8xf32>
    %64 = tpu.matmul %63, %49, %cst_34 {dimension_numbers = #tpu.dot_dimension_numbers<[1], [0], [0], [1], [0, 0, 1, 1], [], []>} : vector<8x16xbf16>, vector<16x8xbf16>, vector<8x8xf32> -> vector<8x8xf32>
    %65 = arith.truncf %64 : vector<8x8xf32> to vector<8x8xbf16>
    %c0_35 = arith.constant 0 : index
    %c0_36 = arith.constant 0 : index
    %66 = vector.load %arg25[%c0_35, %c0_36] : memref<8x32xbf16, #tpu.memory_space<vmem>>, vector<8x8xbf16>
    tpu.vector_store %arg25[%c0_35, %c0_36], %65 {strides = array<i32>} : memref<8x32xbf16, #tpu.memory_space<vmem>>, vector<8x8xbf16>,
    %c0_37 = arith.constant 0 : index
    %c8 = arith.constant 8 : index
    %67 = vector.load %arg22[%c0_37, %c8] : memref<8x32xbf16, #tpu.memory_space<vmem>>, vector<8x8xbf16>
    %c0_38 = arith.constant 0 : index
    %c8_39 = arith.constant 8 : index
    %68 = vector.load %arg23[%c0_38, %c8_39] : memref<16x32xbf16, #tpu.memory_space<vmem>>, vector<16x8xbf16>
    %c0_40 = arith.constant 0 : index
    %c8_41 = arith.constant 8 : index
    %69 = vector.load %arg24[%c0_40, %c8_41] : memref<16x32xbf16, #tpu.memory_space<vmem>>, vector<16x8xbf16>
    %cst_42 = arith.constant dense<0.000000e+00> : vector<8x16xf32>
    %70 = tpu.matmul %67, %68, %cst_42 {dimension_numbers = #tpu.dot_dimension_numbers<[1], [1], [0], [0], [0, 0, 1, 0], [], []>} : vector<8x8xbf16>, vector<16x8xbf16>, vector<8x16xf32> -> vector<8x16xf32>
    %71 = vector.broadcast %46 : vector<1x16xf32> to vector<8x16xf32>
    %72 = arith.addf %70, %71 : vector<8x16xf32>
    %cst_43 = arith.constant dense<0xFF800000> : vector<8xf32>
    %73 = vector.multi_reduction <maximumf>, %72, %cst_43 [1] : vector<8x16xf32> to vector<8xf32>
    %74 = vector.shape_cast %73 : vector<8xf32> to vector<8x1xf32>
    %75 = vector.broadcast %74 : vector<8x1xf32> to vector<8x16xf32>
    %76 = arith.subf %72, %75 : vector<8x16xf32>
    %77 = math.exp %76 : vector<8x16xf32>
    %cst_44 = arith.constant dense<0.000000e+00> : vector<8xf32>
    %78 = vector.multi_reduction <add>, %77, %cst_44 [1] : vector<8x16xf32> to vector<8xf32>
    %79 = vector.shape_cast %78 : vector<8xf32> to vector<8x1xf32>
    %80 = tpu.reciprocal %79 {approx = true} : vector<8x1xf32> -> vector<8x1xf32>
    %81 = vector.broadcast %80 : vector<8x1xf32> to vector<8x16xf32>
    %82 = arith.mulf %77, %81 : vector<8x16xf32>
    %83 = arith.truncf %82 : vector<8x16xf32> to vector<8x16xbf16>
    %cst_45 = arith.constant dense<0.000000e+00> : vector<8x8xf32>
    %84 = tpu.matmul %83, %69, %cst_45 {dimension_numbers = #tpu.dot_dimension_numbers<[1], [0], [0], [1], [0, 0, 1, 1], [], []>} : vector<8x16xbf16>, vector<16x8xbf16>, vector<8x8xf32> -> vector<8x8xf32>
    %85 = arith.truncf %84 : vector<8x8xf32> to vector<8x8xbf16>
    %c0_46 = arith.constant 0 : index
    %c8_47 = arith.constant 8 : index
    %86 = vector.load %arg25[%c0_46, %c8_47] : memref<8x32xbf16, #tpu.memory_space<vmem>>, vector<8x8xbf16>
    tpu.vector_store %arg25[%c0_46, %c8_47], %85 {strides = array<i32>} : memref<8x32xbf16, #tpu.memory_space<vmem>>, vector<8x8xbf16>,
    %c0_48 = arith.constant 0 : index
    %c16 = arith.constant 16 : index
    %87 = vector.load %arg22[%c0_48, %c16] : memref<8x32xbf16, #tpu.memory_space<vmem>>, vector<8x8xbf16>
    %c0_49 = arith.constant 0 : index
    %c16_50 = arith.constant 16 : index
    %88 = vector.load %arg23[%c0_49, %c16_50] : memref<16x32xbf16, #tpu.memory_space<vmem>>, vector<16x8xbf16>
    %c0_51 = arith.constant 0 : index
    %c16_52 = arith.constant 16 : index
    %89 = vector.load %arg24[%c0_51, %c16_52] : memref<16x32xbf16, #tpu.memory_space<vmem>>, vector<16x8xbf16>
    %cst_53 = arith.constant dense<0.000000e+00> : vector<8x16xf32>
    %90 = tpu.matmul %87, %88, %cst_53 {dimension_numbers = #tpu.dot_dimension_numbers<[1], [1], [0], [0], [0, 0, 1, 0], [], []>} : vector<8x8xbf16>, vector<16x8xbf16>, vector<8x16xf32> -> vector<8x16xf32>
    %91 = vector.broadcast %46 : vector<1x16xf32> to vector<8x16xf32>
    %92 = arith.addf %90, %91 : vector<8x16xf32>
    %cst_54 = arith.constant dense<0xFF800000> : vector<8xf32>
    %93 = vector.multi_reduction <maximumf>, %92, %cst_54 [1] : vector<8x16xf32> to vector<8xf32>
    %94 = vector.shape_cast %93 : vector<8xf32> to vector<8x1xf32>
    %95 = vector.broadcast %94 : vector<8x1xf32> to vector<8x16xf32>
    %96 = arith.subf %92, %95 : vector<8x16xf32>
    %97 = math.exp %96 : vector<8x16xf32>
    %cst_55 = arith.constant dense<0.000000e+00> : vector<8xf32>
    %98 = vector.multi_reduction <add>, %97, %cst_55 [1] : vector<8x16xf32> to vector<8xf32>
    %99 = vector.shape_cast %98 : vector<8xf32> to vector<8x1xf32>
    %100 = tpu.reciprocal %99 {approx = true} : vector<8x1xf32> -> vector<8x1xf32>
    %101 = vector.broadcast %100 : vector<8x1xf32> to vector<8x16xf32>
    %102 = arith.mulf %97, %101 : vector<8x16xf32>
    %103 = arith.truncf %102 : vector<8x16xf32> to vector<8x16xbf16>
    %cst_56 = arith.constant dense<0.000000e+00> : vector<8x8xf32>
    %104 = tpu.matmul %103, %89, %cst_56 {dimension_numbers = #tpu.dot_dimension_numbers<[1], [0], [0], [1], [0, 0, 1, 1], [], []>} : vector<8x16xbf16>, vector<16x8xbf16>, vector<8x8xf32> -> vector<8x8xf32>
    %105 = arith.truncf %104 : vector<8x8xf32> to vector<8x8xbf16>
    %c0_57 = arith.constant 0 : index
    %c16_58 = arith.constant 16 : index
    %106 = vector.load %arg25[%c0_57, %c16_58] : memref<8x32xbf16, #tpu.memory_space<vmem>>, vector<8x8xbf16>
    tpu.vector_store %arg25[%c0_57, %c16_58], %105 {strides = array<i32>} : memref<8x32xbf16, #tpu.memory_space<vmem>>, vector<8x8xbf16>,
    %c0_59 = arith.constant 0 : index
    %c24 = arith.constant 24 : index
    %107 = vector.load %arg22[%c0_59, %c24] : memref<8x32xbf16, #tpu.memory_space<vmem>>, vector<8x8xbf16>
    %c0_60 = arith.constant 0 : index
    %c24_61 = arith.constant 24 : index
    %108 = vector.load %arg23[%c0_60, %c24_61] : memref<16x32xbf16, #tpu.memory_space<vmem>>, vector<16x8xbf16>
    %c0_62 = arith.constant 0 : index
    %c24_63 = arith.constant 24 : index
    %109 = vector.load %arg24[%c0_62, %c24_63] : memref<16x32xbf16, #tpu.memory_space<vmem>>, vector<16x8xbf16>
    %cst_64 = arith.constant dense<0.000000e+00> : vector<8x16xf32>
    %110 = tpu.matmul %107, %108, %cst_64 {dimension_numbers = #tpu.dot_dimension_numbers<[1], [1], [0], [0], [0, 0, 1, 0], [], []>} : vector<8x8xbf16>, vector<16x8xbf16>, vector<8x16xf32> -> vector<8x16xf32>
    %111 = vector.broadcast %46 : vector<1x16xf32> to vector<8x16xf32>
    %112 = arith.addf %110, %111 : vector<8x16xf32>
    %cst_65 = arith.constant dense<0xFF800000> : vector<8xf32>
    %113 = vector.multi_reduction <maximumf>, %112, %cst_65 [1] : vector<8x16xf32> to vector<8xf32>
    %114 = vector.shape_cast %113 : vector<8xf32> to vector<8x1xf32>
    %115 = vector.broadcast %114 : vector<8x1xf32> to vector<8x16xf32>
    %116 = arith.subf %112, %115 : vector<8x16xf32>
    %117 = math.exp %116 : vector<8x16xf32>
    %cst_66 = arith.constant dense<0.000000e+00> : vector<8xf32>
    %118 = vector.multi_reduction <add>, %117, %cst_66 [1] : vector<8x16xf32> to vector<8xf32>
    %119 = vector.shape_cast %118 : vector<8xf32> to vector<8x1xf32>
    %120 = tpu.reciprocal %119 {approx = true} : vector<8x1xf32> -> vector<8x1xf32>
    %121 = vector.broadcast %120 : vector<8x1xf32> to vector<8x16xf32>
    %122 = arith.mulf %117, %121 : vector<8x16xf32>
    %123 = arith.truncf %122 : vector<8x16xf32> to vector<8x16xbf16>
    %cst_67 = arith.constant dense<0.000000e+00> : vector<8x8xf32>
    %124 = tpu.matmul %123, %109, %cst_67 {dimension_numbers = #tpu.dot_dimension_numbers<[1], [0], [0], [1], [0, 0, 1, 1], [], []>} : vector<8x16xbf16>, vector<16x8xbf16>, vector<8x8xf32> -> vector<8x8xf32>
    %125 = arith.truncf %124 : vector<8x8xf32> to vector<8x8xbf16>
    %c0_68 = arith.constant 0 : index
    %c24_69 = arith.constant 24 : index
    %126 = vector.load %arg25[%c0_68, %c24_69] : memref<8x32xbf16, #tpu.memory_space<vmem>>, vector<8x8xbf16>
    tpu.vector_store %arg25[%c0_68, %c24_69], %125 {strides = array<i32>} : memref<8x32xbf16, #tpu.memory_space<vmem>>, vector<8x8xbf16>,
    %c0_70 = arith.constant 0 : index
    %c0_71 = arith.constant 0 : index
    %127 = vector.load %arg25[%c0_70, %c0_71] : memref<8x32xbf16, #tpu.memory_space<vmem>>, vector<8x32xbf16>
    %c0_72 = arith.constant 0 : index
    %c0_73 = arith.constant 0 : index
    %128 = vector.load %arg13[%c0_72, %c0_73] : memref<32x32xbf16, #tpu.memory_space<vmem>>, vector<32x32xbf16>
    %cst_74 = arith.constant dense<0.000000e+00> : vector<8x32xf32>
    %129 = tpu.matmul %127, %128, %cst_74 {dimension_numbers = #tpu.dot_dimension_numbers<[1], [0], [0], [1], [0, 0, 1, 1], [], []>} : vector<8x32xbf16>, vector<32x32xbf16>, vector<8x32xf32> -> vector<8x32xf32>
    %130 = arith.addf %6, %129 : vector<8x32xf32>
    %c0_75 = arith.constant 0 : index
    %c0_76 = arith.constant 0 : index
    %131 = vector.load %arg14[%c0_75, %c0_76] : memref<1x32xf32, #tpu.memory_space<vmem>>, vector<1x32xf32>
    %132 = vector.broadcast %131 : vector<1x32xf32> to vector<8x32xf32>
    %133 = arith.addf %130, %132 : vector<8x32xf32>
    %c0_77 = arith.constant 0 : index
    %c0_78 = arith.constant 0 : index
    %134 = vector.load %arg15[%c0_77, %c0_78] : memref<1x32xf32, #tpu.memory_space<vmem>>, vector<1x32xf32>
    %c0_79 = arith.constant 0 : index
    %c0_80 = arith.constant 0 : index
    %135 = vector.load %arg16[%c0_79, %c0_80] : memref<1x32xf32, #tpu.memory_space<vmem>>, vector<1x32xf32>
    %cst_81 = arith.constant dense<0.000000e+00> : vector<8xf32>
    %136 = vector.multi_reduction <add>, %133, %cst_81 [1] : vector<8x32xf32> to vector<8xf32>
    %137 = vector.shape_cast %136 : vector<8xf32> to vector<8x1xf32>
    %cst_82 = arith.constant 3.200000e+01 : f32
    %138 = vector.broadcast %cst_82 : f32 to vector<8x1xf32>
    %139 = arith.divf %137, %138 : vector<8x1xf32>
    %140 = vector.broadcast %139 : vector<8x1xf32> to vector<8x32xf32>
    %141 = arith.subf %133, %140 : vector<8x32xf32>
    %142 = arith.mulf %141, %141 : vector<8x32xf32>
    %cst_83 = arith.constant dense<0.000000e+00> : vector<8xf32>
    %143 = vector.multi_reduction <add>, %142, %cst_83 [1] : vector<8x32xf32> to vector<8xf32>
    %144 = vector.shape_cast %143 : vector<8xf32> to vector<8x1xf32>
    %cst_84 = arith.constant 0.0322580636 : f32
    %145 = vector.broadcast %cst_84 : f32 to vector<8x1xf32>
    %146 = arith.mulf %144, %145 : vector<8x1xf32>
    %147 = math.sqrt %146 : vector<8x1xf32>
    %cst_85 = arith.constant 9.99999997E-7 : f32
    %148 = vector.broadcast %cst_85 : f32 to vector<8x1xf32>
    %149 = arith.addf %147, %148 : vector<8x1xf32>
    %150 = tpu.reciprocal %149 {approx = true} : vector<8x1xf32> -> vector<8x1xf32>
    %151 = vector.broadcast %139 : vector<8x1xf32> to vector<8x32xf32>
    %152 = arith.subf %133, %151 : vector<8x32xf32>
    %153 = vector.broadcast %134 : vector<1x32xf32> to vector<8x32xf32>
    %154 = arith.mulf %153, %152 : vector<8x32xf32>
    %155 = vector.broadcast %150 : vector<8x1xf32> to vector<8x32xf32>
    %156 = arith.mulf %154, %155 : vector<8x32xf32>
    %157 = vector.broadcast %135 : vector<1x32xf32> to vector<8x32xf32>
    %158 = arith.addf %156, %157 : vector<8x32xf32>
    %159 = arith.truncf %158 : vector<8x32xf32> to vector<8x32xbf16>
    %c0_86 = arith.constant 0 : index
    %c0_87 = arith.constant 0 : index
    %160 = vector.load %arg17[%c0_86, %c0_87] : memref<32x64xbf16, #tpu.memory_space<vmem>>, vector<32x64xbf16>
    %cst_88 = arith.constant dense<0.000000e+00> : vector<8x64xf32>
    %161 = tpu.matmul %159, %160, %cst_88 {dimension_numbers = #tpu.dot_dimension_numbers<[1], [0], [0], [1], [0, 0, 1, 1], [], []>} : vector<8x32xbf16>, vector<32x64xbf16>, vector<8x64xf32> -> vector<8x64xf32>
    %c0_89 = arith.constant 0 : index
    %c0_90 = arith.constant 0 : index
    %162 = vector.load %arg18[%c0_89, %c0_90] : memref<1x64xf32, #tpu.memory_space<vmem>>, vector<1x64xf32>
    %163 = vector.broadcast %162 : vector<1x64xf32> to vector<8x64xf32>
    %164 = arith.addf %161, %163 : vector<8x64xf32>
    %cst_91 = arith.constant 0.000000e+00 : f32
    %165 = vector.broadcast %cst_91 : f32 to vector<8x64xf32>
    %166 = arith.maximumf %164, %165 : vector<8x64xf32>
    %167 = arith.truncf %166 : vector<8x64xf32> to vector<8x64xbf16>
    %c0_92 = arith.constant 0 : index
    %c0_93 = arith.constant 0 : index
    %168 = vector.load %arg19[%c0_92, %c0_93] : memref<64x32xbf16, #tpu.memory_space<vmem>>, vector<64x32xbf16>
    %cst_94 = arith.constant dense<0.000000e+00> : vector<8x32xf32>
    %169 = tpu.matmul %167, %168, %cst_94 {dimension_numbers = #tpu.dot_dimension_numbers<[1], [0], [0], [1], [0, 0, 1, 1], [], []>} : vector<8x64xbf16>, vector<64x32xbf16>, vector<8x32xf32> -> vector<8x32xf32>
    %c0_95 = arith.constant 0 : index
    %c0_96 = arith.constant 0 : index
    %170 = vector.load %arg20[%c0_95, %c0_96] : memref<1x32xf32, #tpu.memory_space<vmem>>, vector<1x32xf32>
    %171 = vector.broadcast %170 : vector<1x32xf32> to vector<8x32xf32>
    %172 = arith.addf %169, %171 : vector<8x32xf32>
    %173 = arith.addf %133, %172 : vector<8x32xf32>
    %c0_97 = arith.constant 0 : index
    %c0_98 = arith.constant 0 : index
    %c0_99 = arith.constant 0 : index
    %174 = vector.load %arg21[%c0_97, %c0_98, %c0_99] : memref<1x8x32xf32, #tpu.memory_space<vmem>>, vector<1x8x32xf32>
    %175 = vector.shape_cast %174 : vector<1x8x32xf32> to vector<8x32xf32>
    %176 = vector.shape_cast %173 : vector<8x32xf32> to vector<1x8x32xf32>
    tpu.vector_store %arg21[%c0_97, %c0_98, %c0_99], %176 {strides = array<i32>} : memref<1x8x32xf32, #tpu.memory_space<vmem>>, vector<1x8x32xf32>,
    return
  }
  func.func @transform_0(%arg0: i32, %arg1: i32) -> (i32, i32, i32) {
    %c0_i32 = arith.constant 0 : i32
    %c0_i32_0 = arith.constant 0 : i32
    return %arg0, %arg1, %c0_i32 : i32, i32, i32
  }
  func.func @transform_1(%arg0: i32, %arg1: i32) -> (i32, i32, i32) {
    %c0_i32 = arith.constant 0 : i32
    %c0_i32_0 = arith.constant 0 : i32
    %c0_i32_1 = arith.constant 0 : i32
    return %arg0, %c0_i32, %c0_i32_0 : i32, i32, i32
  }
  func.func @transform_2(%arg0: i32, %arg1: i32) -> (i32, i32, i32) {
    %c0_i32 = arith.constant 0 : i32
    %c0_i32_0 = arith.constant 0 : i32
    %c0_i32_1 = arith.constant 0 : i32
    return %arg0, %c0_i32, %c0_i32_0 : i32, i32, i32
  }
  func.func @transform_3(%arg0: i32, %arg1: i32) -> (i32, i32) {
    %c0_i32 = arith.constant 0 : i32
    %c0_i32_0 = arith.constant 0 : i32
    %c0_i32_1 = arith.constant 0 : i32
    return %c0_i32, %c0_i32_0 : i32, i32
  }
  func.func @transform_4(%arg0: i32, %arg1: i32) -> (i32, i32) {
    %c0_i32 = arith.constant 0 : i32
    %c0_i32_0 = arith.constant 0 : i32
    %c0_i32_1 = arith.constant 0 : i32
    return %c0_i32, %c0_i32_0 : i32, i32
  }
  func.func @transform_5(%arg0: i32, %arg1: i32) -> (i32, i32) {
    %c0_i32 = arith.constant 0 : i32
    %c0_i32_0 = arith.constant 0 : i32
    %c0_i32_1 = arith.constant 0 : i32
    return %c0_i32, %c0_i32_0 : i32, i32
  }
  func.func @transform_6(%arg0: i32, %arg1: i32) -> (i32, i32) {
    %c0_i32 = arith.constant 0 : i32
    %c0_i32_0 = arith.constant 0 : i32
    %c0_i32_1 = arith.constant 0 : i32
    return %c0_i32, %c0_i32_0 : i32, i32
  }
  func.func @transform_7(%arg0: i32, %arg1: i32) -> (i32, i32) {
    %c0_i32 = arith.constant 0 : i32
    %c0_i32_0 = arith.constant 0 : i32
    %c0_i32_1 = arith.constant 0 : i32
    return %c0_i32, %c0_i32_0 : i32, i32
  }
  func.func @transform_8(%arg0: i32, %arg1: i32) -> (i32, i32) {
    %c0_i32 = arith.constant 0 : i32
    %c0_i32_0 = arith.constant 0 : i32
    %c0_i32_1 = arith.constant 0 : i32
    return %c0_i32, %c0_i32_0 : i32, i32
  }
  func.func @transform_9(%arg0: i32, %arg1: i32) -> (i32, i32) {
    %c0_i32 = arith.constant 0 : i32
    %c0_i32_0 = arith.constant 0 : i32
    %c0_i32_1 = arith.constant 0 : i32
    return %c0_i32, %c0_i32_0 : i32, i32
  }
  func.func @transform_10(%arg0: i32, %arg1: i32) -> (i32, i32) {
    %c0_i32 = arith.constant 0 : i32
    %c0_i32_0 = arith.constant 0 : i32
    %c0_i32_1 = arith.constant 0 : i32
    return %c0_i32, %c0_i32_0 : i32, i32
  }
  func.func @transform_11(%arg0: i32, %arg1: i32) -> (i32, i32) {
    %c0_i32 = arith.constant 0 : i32
    %c0_i32_0 = arith.constant 0 : i32
    %c0_i32_1 = arith.constant 0 : i32
    return %c0_i32, %c0_i32_0 : i32, i32
  }
  func.func @transform_12(%arg0: i32, %arg1: i32) -> (i32, i32) {
    %c0_i32 = arith.constant 0 : i32
    %c0_i32_0 = arith.constant 0 : i32
    %c0_i32_1 = arith.constant 0 : i32
    return %c0_i32, %c0_i32_0 : i32, i32
  }
  func.func @transform_13(%arg0: i32, %arg1: i32) -> (i32, i32) {
    %c0_i32 = arith.constant 0 : i32
    %c0_i32_0 = arith.constant 0 : i32
    %c0_i32_1 = arith.constant 0 : i32
    return %c0_i32, %c0_i32_0 : i32, i32
  }
  func.func @transform_14(%arg0: i32, %arg1: i32) -> (i32, i32) {
    %c0_i32 = arith.constant 0 : i32
    %c0_i32_0 = arith.constant 0 : i32
    %c0_i32_1 = arith.constant 0 : i32
    return %c0_i32, %c0_i32_0 : i32, i32
  }
  func.func @transform_15(%arg0: i32, %arg1: i32) -> (i32, i32) {
    %c0_i32 = arith.constant 0 : i32
    %c0_i32_0 = arith.constant 0 : i32
    %c0_i32_1 = arith.constant 0 : i32
    return %c0_i32, %c0_i32_0 : i32, i32
  }
  func.func @transform_16(%arg0: i32, %arg1: i32) -> (i32, i32) {
    %c0_i32 = arith.constant 0 : i32
    %c0_i32_0 = arith.constant 0 : i32
    %c0_i32_1 = arith.constant 0 : i32
    return %c0_i32, %c0_i32_0 : i32, i32
  }
  func.func @transform_17(%arg0: i32, %arg1: i32) -> (i32, i32) {
    %c0_i32 = arith.constant 0 : i32
    %c0_i32_0 = arith.constant 0 : i32
    %c0_i32_1 = arith.constant 0 : i32
    return %c0_i32, %c0_i32_0 : i32, i32
  }
  func.func @transform_18(%arg0: i32, %arg1: i32) -> (i32, i32) {
    %c0_i32 = arith.constant 0 : i32
    %c0_i32_0 = arith.constant 0 : i32
    %c0_i32_1 = arith.constant 0 : i32
    return %c0_i32, %c0_i32_0 : i32, i32
  }
  func.func @transform_19(%arg0: i32, %arg1: i32) -> (i32, i32, i32) {
    %c0_i32 = arith.constant 0 : i32
    %c0_i32_0 = arith.constant 0 : i32
    return %arg0, %arg1, %c0_i32 : i32, i32, i32
  }
}

</mosaic_0001>

<llo_original>
// kernel: _transformer_block_jit.1
$region0: #{_transformer_block_jit.1}
  #allocation0 [shape = 'u32[]', space=smem, size = 0x4, offset = 0x4, fixed_abs, tag = 'smem constant byte address 0x4 - core index']
  #allocation1 [shape = 'u32[144,128]{1,0:T(1,128)}', space=vmem, size = 0x12000, scoped, tag = 'internal scratch']
  #allocation2 [shape = 'bf16[8,32]{1,0:T(8,128)(2,1)}', space=vmem, size = 0x800, scoped, tag = 'scratch operand']
  #allocation3 [shape = 'bf16[16,32]{1,0:T(8,128)(2,1)}', space=vmem, size = 0x1000, scoped, tag = 'scratch operand']
  #allocation4 [shape = 'bf16[16,32]{1,0:T(8,128)(2,1)}', space=vmem, size = 0x1000, scoped, tag = 'scratch operand']
  #allocation5 [shape = 'bf16[8,32]{1,0:T(8,128)(2,1)}', space=vmem, size = 0x800, scoped, tag = 'scratch operand']
  %s0 = inlined_call_operand.vmem [shape: f32[2,16,32], index: 0, kind: input, shape index: {}]
  %s1 = inlined_call_operand.vmem [shape: bf16[2,16,32], index: 1, kind: input, shape index: {}]
  %s2 = inlined_call_operand.vmem [shape: f32[2,1,16], index: 2, kind: input, shape index: {}]
  %s3 = inlined_call_operand.vmem [shape: f32[1,32], index: 3, kind: input, shape index: {}]
  %s4 = inlined_call_operand.vmem [shape: f32[1,32], index: 4, kind: input, shape index: {}]
  %s5 = inlined_call_operand.vmem [shape: bf16[32,32], index: 5, kind: input, shape index: {}]
  %s6 = inlined_call_operand.vmem [shape: f32[1,32], index: 6, kind: input, shape index: {}]
  %s7 = inlined_call_operand.vmem [shape: bf16[32,32], index: 7, kind: input, shape index: {}]
  %s8 = inlined_call_operand.vmem [shape: f32[1,32], index: 8, kind: input, shape index: {}]
  %s9 = inlined_call_operand.vmem [shape: bf16[32,32], index: 9, kind: input, shape index: {}]
  %s10 = inlined_call_operand.vmem [shape: f32[1,32], index: 10, kind: input, shape index: {}]
  %s11 = inlined_call_operand.vmem [shape: bf16[32,32], index: 11, kind: input, shape index: {}]
  %s12 = inlined_call_operand.vmem [shape: f32[1,32], index: 12, kind: input, shape index: {}]
  %s13 = inlined_call_operand.vmem [shape: f32[1,32], index: 13, kind: input, shape index: {}]
  %s14 = inlined_call_operand.vmem [shape: f32[1,32], index: 14, kind: input, shape index: {}]
  %s15 = inlined_call_operand.vmem [shape: bf16[32,64], index: 15, kind: input, shape index: {}]
  %s16 = inlined_call_operand.vmem [shape: f32[1,64], index: 16, kind: input, shape index: {}]
  %s17 = inlined_call_operand.vmem [shape: bf16[64,32], index: 17, kind: input, shape index: {}]
  %s18 = inlined_call_operand.vmem [shape: f32[1,32], index: 18, kind: input, shape index: {}]
  %s19 = inlined_call_operand.hbm [shape: f32[2,16,32], index: 19, kind: output, shape index: {}]
  %s20 = sld [smem:[#allocation0]]
  $region113: #{_transformer_block_jit.1} parent=0
    _
  %s22 = ssub.s32 1, %s20
  %s23 = scalar_select 0, %s22, %s20
  $region1: #{_transformer_block_jit.1} parent=0
    #allocation6 [shape = 'u8[8192]{0}', space=vmem, size = 0x2000, scoped, tag = 'output window, operand 0']
    #allocation7 [shape = 's32[2]{0}', space=sflag, size = 0x8, scoped, tag = 'scoped memory for _transformer_block_jit.1']
    %24 = vsyncpa [#allocation7], 0
    %s25 = scalar_lea.sflag [#allocation7], 1
    %26 = vsyncpa %s25, 0
    loop: start=0, step=1, limit=6
    $region2: #{_transformer_block_jit.1} parent=1 // loop_pre_header
      _
    $region3: #{_transformer_block_jit.1} parent=1 // loop_header
      %s28 = sphi 0, %s32
      %p29 = scmp.ge.s32.totalorder %s28, 6
      %s35 = sphi 0, %s47
      %s36 = sphi 0, %s43
      %s37 = sphi 0, %s35
      %s38 = sphi 0, %s36
      %s39 = sphi 0, %s37
      %s40 = sphi 0, %s38
      %s52 = sphi 0, %s54
      %s55 = sphi 0, %s52
      %s56 = sphi 0, %s55
      %s72 = sphi 0, %s56
      %s78 = sphi 0, %s80
      %s81 = sphi 0, %s78
      %s82 = sphi 0, %s81
      %s98 = sphi 0, %s82
      %s104 = sphi 0, %s106
      %s107 = sphi 0, %s104
      %s108 = sphi 0, %s107
      %s124 = sphi 0, %s108
      %s128 = sphi 0, %s128
      %s130 = sphi 0, %s128
      %s131 = sphi 0, %s130
      %s145 = sphi 0, %s131
      %s149 = sphi 0, %s149
      %s151 = sphi 0, %s149
      %s152 = sphi 0, %s151
      %s166 = sphi 0, %s152
      %s170 = sphi 0, %s170
      %s172 = sphi 0, %s170
      %s173 = sphi 0, %s172
      %s187 = sphi 0, %s173
      %s191 = sphi 0, %s191
      %s193 = sphi 0, %s191
      %s194 = sphi 0, %s193
      %s208 = sphi 0, %s194
      %s212 = sphi 0, %s212
      %s214 = sphi 0, %s212
      %s215 = sphi 0, %s214
      %s229 = sphi 0, %s215
      %s233 = sphi 0, %s233
      %s235 = sphi 0, %s233
      %s236 = sphi 0, %s235
      %s250 = sphi 0, %s236
      %s254 = sphi 0, %s254
      %s256 = sphi 0, %s254
      %s257 = sphi 0, %s256
      %s271 = sphi 0, %s257
      %s275 = sphi 0, %s275
      %s277 = sphi 0, %s275
      %s278 = sphi 0, %s277
      %s292 = sphi 0, %s278
      %s296 = sphi 0, %s296
      %s298 = sphi 0, %s296
      %s299 = sphi 0, %s298
      %s313 = sphi 0, %s299
      %s317 = sphi 0, %s317
      %s319 = sphi 0, %s317
      %s320 = sphi 0, %s319
      %s334 = sphi 0, %s320
      %s338 = sphi 0, %s338
      %s340 = sphi 0, %s338
      %s341 = sphi 0, %s340
      %s355 = sphi 0, %s341
      %s359 = sphi 0, %s359
      %s361 = sphi 0, %s359
      %s362 = sphi 0, %s361
      %s376 = sphi 0, %s362
      %s380 = sphi 0, %s380
      %s382 = sphi 0, %s380
      %s383 = sphi 0, %s382
      %s397 = sphi 0, %s383
      %s401 = sphi 0, %s401
      %s403 = sphi 0, %s401
      %s404 = sphi 0, %s403
      %s418 = sphi 0, %s404
      %s422 = sphi 0, %s422
      %s424 = sphi 0, %s422
      %s425 = sphi 0, %s424
      %s439 = sphi 0, %s425
      %s443 = sphi 0, %s443
      %s445 = sphi 0, %s443
      %s446 = sphi 0, %s445
      %s460 = sphi 0, %s446
      %s468 = sphi 0, %s470
      %s471 = sphi 0, %s468
      %s472 = sphi 0, %s471
      %s488 = sphi 0, %s472
    $region4: #{_transformer_block_jit.1} parent=1 // loop_header_branch
      %31 = sbr.rel (%p29) target = $region8
    $region5: #{_transformer_block_jit.1} parent=1 // loop_body
      %s33 = ssub.s32 %s28, 1
      %s34 = ssub.s32 %s28, 2
      %s41 = sadd.s32 1, %s36
      %p42 = scmp.ge.s32.totalorder %s41, 2
      %s43 = scalar_select %p42, 0, %s41
      %s44 = sadd.s32 1, %s35
      %s45 = scalar_select %p42, %s44, %s35
      %p46 = scmp.ge.s32.totalorder %s45, 2
      %s47 = scalar_select %p46, 0, %s45
      %s48 = ssub.s32 %s35, %s47
      %s49 = ssub.s32 %s36, %s43
      %s50 = sor.u32 %s48, %s49
      %p51 = scmp.eq.s32.totalorder %s50, 0
      %s53 = sadd.s32 %s52, 1
      %s54 = scalar_select %p51, %s52, %s53
      %p57 = pneg %p51
      %p58 = scmp.eq.s32.totalorder %s28, 3
      %p59 = por %p57, %p58
      %p60 = scmp.ne.s32.totalorder %s52, %s55
      %p61 = scmp.eq.s32.totalorder %s28, 0
      %p62 = por %p60, %p61
      %p63 = scmp.ne.s32.totalorder %s52, %s55
      %p64 = scmp.eq.s32.totalorder %s33, 3
      %p65 = por %p63, %p64
      %p66 = scmp.ne.s32.totalorder %s55, %s56
      %p67 = scmp.eq.s32.totalorder %s33, 0
      %p68 = por %p66, %p67
      %p69 = scmp.ne.s32.totalorder %s55, %s56
      %p70 = scmp.eq.s32.totalorder %s34, 3
      %p71 = por %p69, %p70
      %p73 = scmp.ne.s32.totalorder %s56, %s72
      %p74 = scmp.eq.s32.totalorder %s34, 0
      %p75 = por %p73, %p74
      %s76 = ssub.s32 %s35, %s47
      %p77 = scmp.eq.s32.totalorder %s76, 0
      %s79 = sadd.s32 %s78, 1
      %s80 = scalar_select %p77, %s78, %s79
      %p83 = pneg %p77
      %p84 = scmp.eq.s32.totalorder %s28, 3
      %p85 = por %p83, %p84
      %p86 = scmp.ne.s32.totalorder %s78, %s81
      %p87 = scmp.eq.s32.totalorder %s28, 0
      %p88 = por %p86, %p87
      %p89 = scmp.ne.s32.totalorder %s78, %s81
      %p90 = scmp.eq.s32.totalorder %s33, 3
      %p91 = por %p89, %p90
      %p92 = scmp.ne.s32.totalorder %s81, %s82
      %p93 = scmp.eq.s32.totalorder %s33, 0
      %p94 = por %p92, %p93
      %p95 = scmp.ne.s32.totalorder %s81, %s82
      %p96 = scmp.eq.s32.totalorder %s34, 3
      %p97 = por %p95, %p96
      %p99 = scmp.ne.s32.totalorder %s82, %s98
      %p100 = scmp.eq.s32.totalorder %s34, 0
      %p101 = por %p99, %p100
      %s102 = ssub.s32 %s35, %s47
      %p103 = scmp.eq.s32.totalorder %s102, 0
      %s105 = sadd.s32 %s104, 1
      %s106 = scalar_select %p103, %s104, %s105
      %p109 = pneg %p103
      %p110 = scmp.eq.s32.totalorder %s28, 3
      %p111 = por %p109, %p110
      %p112 = scmp.ne.s32.totalorder %s104, %s107
      %p113 = scmp.eq.s32.totalorder %s28, 0
      %p114 = por %p112, %p113
      %p115 = scmp.ne.s32.totalorder %s104, %s107
      %p116 = scmp.eq.s32.totalorder %s33, 3
      %p117 = por %p115, %p116
      %p118 = scmp.ne.s32.totalorder %s107, %s108
      %p119 = scmp.eq.s32.totalorder %s33, 0
      %p120 = por %p118, %p119
      %p121 = scmp.ne.s32.totalorder %s107, %s108
      %p122 = scmp.eq.s32.totalorder %s34, 3
      %p123 = por %p121, %p122
      %p125 = scmp.ne.s32.totalorder %s108, %s124
      %p126 = scmp.eq.s32.totalorder %s34, 0
      %p127 = por %p125, %p126
      %s129 = sadd.s32 %s128, 1
      %p132 = scmp.eq.s32.totalorder %s28, 3
      %p133 = scmp.ne.s32.totalorder %s128, %s130
      %p134 = scmp.eq.s32.totalorder %s28, 0
      %p135 = por %p133, %p134
      %p136 = scmp.ne.s32.totalorder %s128, %s130
      %p137 = scmp.eq.s32.totalorder %s33, 3
      %p138 = por %p136, %p137
      %p139 = scmp.ne.s32.totalorder %s130, %s131
      %p140 = scmp.eq.s32.totalorder %s33, 0
      %p141 = por %p139, %p140
      %p142 = scmp.ne.s32.totalorder %s130, %s131
      %p143 = scmp.eq.s32.totalorder %s34, 3
      %p144 = por %p142, %p143
      %p146 = scmp.ne.s32.totalorder %s131, %s145
      %p147 = scmp.eq.s32.totalorder %s34, 0
      %p148 = por %p146, %p147
      %s150 = sadd.s32 %s149, 1
      %p153 = scmp.eq.s32.totalorder %s28, 3
      %p154 = scmp.ne.s32.totalorder %s149, %s151
      %p155 = scmp.eq.s32.totalorder %s28, 0
      %p156 = por %p154, %p155
      %p157 = scmp.ne.s32.totalorder %s149, %s151
      %p158 = scmp.eq.s32.totalorder %s33, 3
      %p159 = por %p157, %p158
      %p160 = scmp.ne.s32.totalorder %s151, %s152
      %p161 = scmp.eq.s32.totalorder %s33, 0
      %p162 = por %p160, %p161
      %p163 = scmp.ne.s32.totalorder %s151, %s152
      %p164 = scmp.eq.s32.totalorder %s34, 3
      %p165 = por %p163, %p164
      %p167 = scmp.ne.s32.totalorder %s152, %s166
      %p168 = scmp.eq.s32.totalorder %s34, 0
      %p169 = por %p167, %p168
      %s171 = sadd.s32 %s170, 1
      %p174 = scmp.eq.s32.totalorder %s28, 3
      %p175 = scmp.ne.s32.totalorder %s170, %s172
      %p176 = scmp.eq.s32.totalorder %s28, 0
      %p177 = por %p175, %p176
      %p178 = scmp.ne.s32.totalorder %s170, %s172
      %p179 = scmp.eq.s32.totalorder %s33, 3
      %p180 = por %p178, %p179
      %p181 = scmp.ne.s32.totalorder %s172, %s173
      %p182 = scmp.eq.s32.totalorder %s33, 0
      %p183 = por %p181, %p182
      %p184 = scmp.ne.s32.totalorder %s172, %s173
      %p185 = scmp.eq.s32.totalorder %s34, 3
      %p186 = por %p184, %p185
      %p188 = scmp.ne.s32.totalorder %s173, %s187
      %p189 = scmp.eq.s32.totalorder %s34, 0
      %p190 = por %p188, %p189
      %s192 = sadd.s32 %s191, 1
      %p195 = scmp.eq.s32.totalorder %s28, 3
      %p196 = scmp.ne.s32.totalorder %s191, %s193
      %p197 = scmp.eq.s32.totalorder %s28, 0
      %p198 = por %p196, %p197
      %p199 = scmp.ne.s32.totalorder %s191, %s193
      %p200 = scmp.eq.s32.totalorder %s33, 3
      %p201 = por %p199, %p200
      %p202 = scmp.ne.s32.totalorder %s193, %s194
      %p203 = scmp.eq.s32.totalorder %s33, 0
      %p204 = por %p202, %p203
      %p205 = scmp.ne.s32.totalorder %s193, %s194
      %p206 = scmp.eq.s32.totalorder %s34, 3
      %p207 = por %p205, %p206
      %p209 = scmp.ne.s32.totalorder %s194, %s208
      %p210 = scmp.eq.s32.totalorder %s34, 0
      %p211 = por %p209, %p210
      %s213 = sadd.s32 %s212, 1
      %p216 = scmp.eq.s32.totalorder %s28, 3
      %p217 = scmp.ne.s32.totalorder %s212, %s214
      %p218 = scmp.eq.s32.totalorder %s28, 0
      %p219 = por %p217, %p218
      %p220 = scmp.ne.s32.totalorder %s212, %s214
      %p221 = scmp.eq.s32.totalorder %s33, 3
      %p222 = por %p220, %p221
      %p223 = scmp.ne.s32.totalorder %s214, %s215
      %p224 = scmp.eq.s32.totalorder %s33, 0
      %p225 = por %p223, %p224
      %p226 = scmp.ne.s32.totalorder %s214, %s215
      %p227 = scmp.eq.s32.totalorder %s34, 3
      %p228 = por %p226, %p227
      %p230 = scmp.ne.s32.totalorder %s215, %s229
      %p231 = scmp.eq.s32.totalorder %s34, 0
      %p232 = por %p230, %p231
      %s234 = sadd.s32 %s233, 1
      %p237 = scmp.eq.s32.totalorder %s28, 3
      %p238 = scmp.ne.s32.totalorder %s233, %s235
      %p239 = scmp.eq.s32.totalorder %s28, 0
      %p240 = por %p238, %p239
      %p241 = scmp.ne.s32.totalorder %s233, %s235
      %p242 = scmp.eq.s32.totalorder %s33, 3
      %p243 = por %p241, %p242
      %p244 = scmp.ne.s32.totalorder %s235, %s236
      %p245 = scmp.eq.s32.totalorder %s33, 0
      %p246 = por %p244, %p245
      %p247 = scmp.ne.s32.totalorder %s235, %s236
      %p248 = scmp.eq.s32.totalorder %s34, 3
      %p249 = por %p247, %p248
      %p251 = scmp.ne.s32.totalorder %s236, %s250
      %p252 = scmp.eq.s32.totalorder %s34, 0
      %p253 = por %p251, %p252
      %s255 = sadd.s32 %s254, 1
      %p258 = scmp.eq.s32.totalorder %s28, 3
      %p259 = scmp.ne.s32.totalorder %s254, %s256
      %p260 = scmp.eq.s32.totalorder %s28, 0
      %p261 = por %p259, %p260
      %p262 = scmp.ne.s32.totalorder %s254, %s256
      %p263 = scmp.eq.s32.totalorder %s33, 3
      %p264 = por %p262, %p263
      %p265 = scmp.ne.s32.totalorder %s256, %s257
      %p266 = scmp.eq.s32.totalorder %s33, 0
      %p267 = por %p265, %p266
      %p268 = scmp.ne.s32.totalorder %s256, %s257
      %p269 = scmp.eq.s32.totalorder %s34, 3
      %p270 = por %p268, %p269
      %p272 = scmp.ne.s32.totalorder %s257, %s271
      %p273 = scmp.eq.s32.totalorder %s34, 0
      %p274 = por %p272, %p273
      %s276 = sadd.s32 %s275, 1
      %p279 = scmp.eq.s32.totalorder %s28, 3
      %p280 = scmp.ne.s32.totalorder %s275, %s277
      %p281 = scmp.eq.s32.totalorder %s28, 0
      %p282 = por %p280, %p281
      %p283 = scmp.ne.s32.totalorder %s275, %s277
      %p284 = scmp.eq.s32.totalorder %s33, 3
      %p285 = por %p283, %p284
      %p286 = scmp.ne.s32.totalorder %s277, %s278
      %p287 = scmp.eq.s32.totalorder %s33, 0
      %p288 = por %p286, %p287
      %p289 = scmp.ne.s32.totalorder %s277, %s278
      %p290 = scmp.eq.s32.totalorder %s34, 3
      %p291 = por %p289, %p290
      %p293 = scmp.ne.s32.totalorder %s278, %s292
      %p294 = scmp.eq.s32.totalorder %s34, 0
      %p295 = por %p293, %p294
      %s297 = sadd.s32 %s296, 1
      %p300 = scmp.eq.s32.totalorder %s28, 3
      %p301 = scmp.ne.s32.totalorder %s296, %s298
      %p302 = scmp.eq.s32.totalorder %s28, 0
      %p303 = por %p301, %p302
      %p304 = scmp.ne.s32.totalorder %s296, %s298
      %p305 = scmp.eq.s32.totalorder %s33, 3
      %p306 = por %p304, %p305
      %p307 = scmp.ne.s32.totalorder %s298, %s299
      %p308 = scmp.eq.s32.totalorder %s33, 0
      %p309 = por %p307, %p308
      %p310 = scmp.ne.s32.totalorder %s298, %s299
      %p311 = scmp.eq.s32.totalorder %s34, 3
      %p312 = por %p310, %p311
      %p314 = scmp.ne.s32.totalorder %s299, %s313
      %p315 = scmp.eq.s32.totalorder %s34, 0
      %p316 = por %p314, %p315
      %s318 = sadd.s32 %s317, 1
      %p321 = scmp.eq.s32.totalorder %s28, 3
      %p322 = scmp.ne.s32.totalorder %s317, %s319
      %p323 = scmp.eq.s32.totalorder %s28, 0
      %p324 = por %p322, %p323
      %p325 = scmp.ne.s32.totalorder %s317, %s319
      %p326 = scmp.eq.s32.totalorder %s33, 3
      %p327 = por %p325, %p326
      %p328 = scmp.ne.s32.totalorder %s319, %s320
      %p329 = scmp.eq.s32.totalorder %s33, 0
      %p330 = por %p328, %p329
      %p331 = scmp.ne.s32.totalorder %s319, %s320
      %p332 = scmp.eq.s32.totalorder %s34, 3
      %p333 = por %p331, %p332
      %p335 = scmp.ne.s32.totalorder %s320, %s334
      %p336 = scmp.eq.s32.totalorder %s34, 0
      %p337 = por %p335, %p336
      %s339 = sadd.s32 %s338, 1
      %p342 = scmp.eq.s32.totalorder %s28, 3
      %p343 = scmp.ne.s32.totalorder %s338, %s340
      %p344 = scmp.eq.s32.totalorder %s28, 0
      %p345 = por %p343, %p344
      %p346 = scmp.ne.s32.totalorder %s338, %s340
      %p347 = scmp.eq.s32.totalorder %s33, 3
      %p348 = por %p346, %p347
      %p349 = scmp.ne.s32.totalorder %s340, %s341
      %p350 = scmp.eq.s32.totalorder %s33, 0
      %p351 = por %p349, %p350
      %p352 = scmp.ne.s32.totalorder %s340, %s341
      %p353 = scmp.eq.s32.totalorder %s34, 3
      %p354 = por %p352, %p353
      %p356 = scmp.ne.s32.totalorder %s341, %s355
      %p357 = scmp.eq.s32.totalorder %s34, 0
      %p358 = por %p356, %p357
      %s360 = sadd.s32 %s359, 1
      %p363 = scmp.eq.s32.totalorder %s28, 3
      %p364 = scmp.ne.s32.totalorder %s359, %s361
      %p365 = scmp.eq.s32.totalorder %s28, 0
      %p366 = por %p364, %p365
      %p367 = scmp.ne.s32.totalorder %s359, %s361
      %p368 = scmp.eq.s32.totalorder %s33, 3
      %p369 = por %p367, %p368
      %p370 = scmp.ne.s32.totalorder %s361, %s362
      %p371 = scmp.eq.s32.totalorder %s33, 0
      %p372 = por %p370, %p371
      %p373 = scmp.ne.s32.totalorder %s361, %s362
      %p374 = scmp.eq.s32.totalorder %s34, 3
      %p375 = por %p373, %p374
      %p377 = scmp.ne.s32.totalorder %s362, %s376
      %p378 = scmp.eq.s32.totalorder %s34, 0
      %p379 = por %p377, %p378
      %s381 = sadd.s32 %s380, 1
      %p384 = scmp.eq.s32.totalorder %s28, 3
      %p385 = scmp.ne.s32.totalorder %s380, %s382
      %p386 = scmp.eq.s32.totalorder %s28, 0
      %p387 = por %p385, %p386
      %p388 = scmp.ne.s32.totalorder %s380, %s382
      %p389 = scmp.eq.s32.totalorder %s33, 3
      %p390 = por %p388, %p389
      %p391 = scmp.ne.s32.totalorder %s382, %s383
      %p392 = scmp.eq.s32.totalorder %s33, 0
      %p393 = por %p391, %p392
      %p394 = scmp.ne.s32.totalorder %s382, %s383
      %p395 = scmp.eq.s32.totalorder %s34, 3
      %p396 = por %p394, %p395
      %p398 = scmp.ne.s32.totalorder %s383, %s397
      %p399 = scmp.eq.s32.totalorder %s34, 0
      %p400 = por %p398, %p399
      %s402 = sadd.s32 %s401, 1
      %p405 = scmp.eq.s32.totalorder %s28, 3
      %p406 = scmp.ne.s32.totalorder %s401, %s403
      %p407 = scmp.eq.s32.totalorder %s28, 0
      %p408 = por %p406, %p407
      %p409 = scmp.ne.s32.totalorder %s401, %s403
      %p410 = scmp.eq.s32.totalorder %s33, 3
      %p411 = por %p409, %p410
      %p412 = scmp.ne.s32.totalorder %s403, %s404
      %p413 = scmp.eq.s32.totalorder %s33, 0
      %p414 = por %p412, %p413
      %p415 = scmp.ne.s32.totalorder %s403, %s404
      %p416 = scmp.eq.s32.totalorder %s34, 3
      %p417 = por %p415, %p416
      %p419 = scmp.ne.s32.totalorder %s404, %s418
      %p420 = scmp.eq.s32.totalorder %s34, 0
      %p421 = por %p419, %p420
      %s423 = sadd.s32 %s422, 1
      %p426 = scmp.eq.s32.totalorder %s28, 3
      %p427 = scmp.ne.s32.totalorder %s422, %s424
      %p428 = scmp.eq.s32.totalorder %s28, 0
      %p429 = por %p427, %p428
      %p430 = scmp.ne.s32.totalorder %s422, %s424
      %p431 = scmp.eq.s32.totalorder %s33, 3
      %p432 = por %p430, %p431
      %p433 = scmp.ne.s32.totalorder %s424, %s425
      %p434 = scmp.eq.s32.totalorder %s33, 0
      %p435 = por %p433, %p434
      %p436 = scmp.ne.s32.totalorder %s424, %s425
      %p437 = scmp.eq.s32.totalorder %s34, 3
      %p438 = por %p436, %p437
      %p440 = scmp.ne.s32.totalorder %s425, %s439
      %p441 = scmp.eq.s32.totalorder %s34, 0
      %p442 = por %p440, %p441
      %s444 = sadd.s32 %s443, 1
      %p447 = scmp.eq.s32.totalorder %s28, 3
      %p448 = scmp.ne.s32.totalorder %s443, %s445
      %p449 = scmp.eq.s32.totalorder %s28, 0
      %p450 = por %p448, %p449
      %p451 = scmp.ne.s32.totalorder %s443, %s445
      %p452 = scmp.eq.s32.totalorder %s33, 3
      %p453 = por %p451, %p452
      %p454 = scmp.ne.s32.totalorder %s445, %s446
      %p455 = scmp.eq.s32.totalorder %s33, 0
      %p456 = por %p454, %p455
      %p457 = scmp.ne.s32.totalorder %s445, %s446
      %p458 = scmp.eq.s32.totalorder %s34, 3
      %p459 = por %p457, %p458
      %p461 = scmp.ne.s32.totalorder %s446, %s460
      %p462 = scmp.eq.s32.totalorder %s34, 0
      %p463 = por %p461, %p462
      %s464 = ssub.s32 %s35, %s47
      %s465 = ssub.s32 %s36, %s43
      %s466 = sor.u32 %s464, %s465
      %p467 = scmp.eq.s32.totalorder %s466, 0
      %s469 = sadd.s32 %s468, 1
      %s470 = scalar_select %p467, %s468, %s469
      %p473 = pneg %p467
      %p474 = scmp.eq.s32.totalorder %s28, 3
      %p475 = por %p473, %p474
      %p476 = scmp.ne.s32.totalorder %s468, %s471
      %p477 = scmp.eq.s32.totalorder %s28, 0
      %p478 = por %p476, %p477
      %p479 = scmp.ne.s32.totalorder %s468, %s471
      %p480 = scmp.eq.s32.totalorder %s33, 3
      %p481 = por %p479, %p480
      %p482 = scmp.ne.s32.totalorder %s471, %s472
      %p483 = scmp.eq.s32.totalorder %s33, 0
      %p484 = por %p482, %p483
      %p485 = scmp.ne.s32.totalorder %s471, %s472
      %p486 = scmp.eq.s32.totalorder %s34, 3
      %p487 = por %p485, %p486
      %p489 = scmp.ne.s32.totalorder %s472, %s488
      %p490 = scmp.eq.s32.totalorder %s34, 0
      %p491 = por %p489, %p490
      %p492 = scmp.le.s32.totalorder 1, %s28
      %p493 = scmp.lt.s32.totalorder %s28, 5
      %p494 = pnand %p492, %p493
      %p495 = pneg %p494
      // Predicated region
      $region9: #{_transformer_block_jit.1} parent=5 // pred_check
        _
      $region10: #{_transformer_block_jit.1} parent=5 // pred_check_branch
        %497 = sbr.rel (%p494) target = $region12
      $region11: #{_transformer_block_jit.1} parent=5 // pred_region
        %s498 = ssub.s32 %s28, 1
        // Predicated region
        $region13: #{_transformer_block_jit.1} parent=11 // pred_check
          %p499 = pneg %p141
        $region14: #{_transformer_block_jit.1} parent=11 // pred_check_branch
          %501 = sbr.rel (%p499) target = $region16
        $region15: #{_transformer_block_jit.1} parent=11 // pred_region
          _
        $region16: #{_transformer_block_jit.1} parent=11 // pred_fallthru
          _
        // Predicated region
        $region17: #{_transformer_block_jit.1} parent=11 // pred_check
          %p502 = pneg %p162
        $region18: #{_transformer_block_jit.1} parent=11 // pred_check_branch
          %504 = sbr.rel (%p502) target = $region20
        $region19: #{_transformer_block_jit.1} parent=11 // pred_region
          _
        $region20: #{_transformer_block_jit.1} parent=11 // pred_fallthru
          _
        // Predicated region
        $region21: #{_transformer_block_jit.1} parent=11 // pred_check
          %p505 = pneg %p183
        $region22: #{_transformer_block_jit.1} parent=11 // pred_check_branch
          %507 = sbr.rel (%p505) target = $region24
        $region23: #{_transformer_block_jit.1} parent=11 // pred_region
          _
        $region24: #{_transformer_block_jit.1} parent=11 // pred_fallthru
          _
        // Predicated region
        $region25: #{_transformer_block_jit.1} parent=11 // pred_check
          %p508 = pneg %p204
        $region26: #{_transformer_block_jit.1} parent=11 // pred_check_branch
          %510 = sbr.rel (%p508) target = $region28
        $region27: #{_transformer_block_jit.1} parent=11 // pred_region
          _
        $region28: #{_transformer_block_jit.1} parent=11 // pred_fallthru
          _
        // Predicated region
        $region29: #{_transformer_block_jit.1} parent=11 // pred_check
          %p511 = pneg %p225
        $region30: #{_transformer_block_jit.1} parent=11 // pred_check_branch
          %513 = sbr.rel (%p511) target = $region32
        $region31: #{_transformer_block_jit.1} parent=11 // pred_region
          _
        $region32: #{_transformer_block_jit.1} parent=11 // pred_fallthru
          _
        // Predicated region
        $region33: #{_transformer_block_jit.1} parent=11 // pred_check
          %p514 = pneg %p246
        $region34: #{_transformer_block_jit.1} parent=11 // pred_check_branch
          %516 = sbr.rel (%p514) target = $region36
        $region35: #{_transformer_block_jit.1} parent=11 // pred_region
          _
        $region36: #{_transformer_block_jit.1} parent=11 // pred_fallthru
          _
        // Predicated region
        $region37: #{_transformer_block_jit.1} parent=11 // pred_check
          %p517 = pneg %p267
        $region38: #{_transformer_block_jit.1} parent=11 // pred_check_branch
          %519 = sbr.rel (%p517) target = $region40
        $region39: #{_transformer_block_jit.1} parent=11 // pred_region
          _
        $region40: #{_transformer_block_jit.1} parent=11 // pred_fallthru
          _
        // Predicated region
        $region41: #{_transformer_block_jit.1} parent=11 // pred_check
          %p520 = pneg %p288
        $region42: #{_transformer_block_jit.1} parent=11 // pred_check_branch
          %522 = sbr.rel (%p520) target = $region44
        $region43: #{_transformer_block_jit.1} parent=11 // pred_region
          _
        $region44: #{_transformer_block_jit.1} parent=11 // pred_fallthru
          _
        // Predicated region
        $region45: #{_transformer_block_jit.1} parent=11 // pred_check
          %p523 = pneg %p309
        $region46: #{_transformer_block_jit.1} parent=11 // pred_check_branch
          %525 = sbr.rel (%p523) target = $region48
        $region47: #{_transformer_block_jit.1} parent=11 // pred_region
          _
        $region48: #{_transformer_block_jit.1} parent=11 // pred_fallthru
          _
        // Predicated region
        $region49: #{_transformer_block_jit.1} parent=11 // pred_check
          %p526 = pneg %p330
        $region50: #{_transformer_block_jit.1} parent=11 // pred_check_branch
          %528 = sbr.rel (%p526) target = $region52
        $region51: #{_transformer_block_jit.1} parent=11 // pred_region
          _
        $region52: #{_transformer_block_jit.1} parent=11 // pred_fallthru
          _
        // Predicated region
        $region53: #{_transformer_block_jit.1} parent=11 // pred_check
          %p529 = pneg %p351
        $region54: #{_transformer_block_jit.1} parent=11 // pred_check_branch
          %531 = sbr.rel (%p529) target = $region56
        $region55: #{_transformer_block_jit.1} parent=11 // pred_region
          _
        $region56: #{_transformer_block_jit.1} parent=11 // pred_fallthru
          _
        // Predicated region
        $region57: #{_transformer_block_jit.1} parent=11 // pred_check
          %p532 = pneg %p372
        $region58: #{_transformer_block_jit.1} parent=11 // pred_check_branch
          %534 = sbr.rel (%p532) target = $region60
        $region59: #{_transformer_block_jit.1} parent=11 // pred_region
          _
        $region60: #{_transformer_block_jit.1} parent=11 // pred_fallthru
          _
        // Predicated region
        $region61: #{_transformer_block_jit.1} parent=11 // pred_check
          %p535 = pneg %p393
        $region62: #{_transformer_block_jit.1} parent=11 // pred_check_branch
          %537 = sbr.rel (%p535) target = $region64
        $region63: #{_transformer_block_jit.1} parent=11 // pred_region
          _
        $region64: #{_transformer_block_jit.1} parent=11 // pred_fallthru
          _
        // Predicated region
        $region65: #{_transformer_block_jit.1} parent=11 // pred_check
          %p538 = pneg %p414
        $region66: #{_transformer_block_jit.1} parent=11 // pred_check_branch
          %540 = sbr.rel (%p538) target = $region68
        $region67: #{_transformer_block_jit.1} parent=11 // pred_region
          _
        $region68: #{_transformer_block_jit.1} parent=11 // pred_fallthru
          _
        // Predicated region
        $region69: #{_transformer_block_jit.1} parent=11 // pred_check
          %p541 = pneg %p435
        $region70: #{_transformer_block_jit.1} parent=11 // pred_check_branch
          %543 = sbr.rel (%p541) target = $region72
        $region71: #{_transformer_block_jit.1} parent=11 // pred_region
          _
        $region72: #{_transformer_block_jit.1} parent=11 // pred_fallthru
          _
        // Predicated region
        $region73: #{_transformer_block_jit.1} parent=11 // pred_check
          %p544 = pneg %p456
        $region74: #{_transformer_block_jit.1} parent=11 // pred_check_branch
          %546 = sbr.rel (%p544) target = $region76
        $region75: #{_transformer_block_jit.1} parent=11 // pred_region
          _
        $region76: #{_transformer_block_jit.1} parent=11 // pred_fallthru
          _
      $region12: #{_transformer_block_jit.1} parent=5 // pred_fallthru
        _
      %p547 = scmp.lt.s32.totalorder %s28, 4
      // Predicated region
      $region77: #{_transformer_block_jit.1} parent=5 // pred_check
        %p548 = pneg %p547
      $region78: #{_transformer_block_jit.1} parent=5 // pred_check_branch
        %550 = sbr.rel (%p548) target = $region80
      $region79: #{_transformer_block_jit.1} parent=5 // pred_region
        // Predicated region
        $region81: #{_transformer_block_jit.1} parent=79 // pred_check
          %p551 = pneg %p62
        $region82: #{_transformer_block_jit.1} parent=79 // pred_check_branch
          %553 = sbr.rel (%p551) target = $region84
        $region83: #{_transformer_block_jit.1} parent=79 // pred_region
          %p554 = scmp.lt.s32.totalorder %s35, 1
          %s555 = scalar_select %p554, %s35, 1
          %p556 = scmp.lt.s32.totalorder %s36, 1
          %s557 = scalar_select %p556, %s36, 1
          %s558 = smul.addr %s555, 2
          %s559 = sadd.s32 %s557, %s558
          %s560 = smul.addr %s559, 8
          %s561 = scalar_lea.vmem %s0, %s560
        $region84: #{_transformer_block_jit.1} parent=79 // pred_fallthru
          _
        // Predicated region
        $region85: #{_transformer_block_jit.1} parent=79 // pred_check
          %p562 = pneg %p88
        $region86: #{_transformer_block_jit.1} parent=79 // pred_check_branch
          %564 = sbr.rel (%p562) target = $region88
        $region87: #{_transformer_block_jit.1} parent=79 // pred_region
          %p565 = scmp.lt.s32.totalorder %s35, 1
          %s566 = scalar_select %p565, %s35, 1
          %s567 = smul.addr %s566, 2
          %s568 = smul.addr %s567, 4
          %s569 = scalar_lea.vmem %s1, %s568
        $region88: #{_transformer_block_jit.1} parent=79 // pred_fallthru
          _
        // Predicated region
        $region89: #{_transformer_block_jit.1} parent=79 // pred_check
          %p570 = pneg %p114
        $region90: #{_transformer_block_jit.1} parent=79 // pred_check_branch
          %572 = sbr.rel (%p570) target = $region92
        $region91: #{_transformer_block_jit.1} parent=79 // pred_region
          %p573 = scmp.lt.s32.totalorder %s35, 1
          %s574 = scalar_select %p573, %s35, 1
          %s575 = scalar_lea.vmem %s2, %s574
        $region92: #{_transformer_block_jit.1} parent=79 // pred_fallthru
          _
      $region80: #{_transformer_block_jit.1} parent=5 // pred_fallthru
        _
      %p576 = scmp.le.s32.totalorder 1, %s28
      %p577 = scmp.lt.s32.totalorder %s28, 5
      %p578 = pnand %p576, %p577
      %p579 = pneg %p578
      // Predicated region
      $region93: #{_transformer_block_jit.1} parent=5 // pred_check
        _
      $region94: #{_transformer_block_jit.1} parent=5 // pred_check_branch
        %581 = sbr.rel (%p578) target = $region96
      $region95: #{_transformer_block_jit.1} parent=5 // pred_region
        %s582 = ssub.s32 %s28, 1
        %p583 = scmp.lt.s32.totalorder %s37, 1
        %s584 = scalar_select %p583, %s37, 1
        %p585 = scmp.lt.s32.totalorder %s38, 1
        %s586 = scalar_select %p585, %s38, 1
        %s587 = smul.addr %s584, 2
        %s588 = sadd.s32 %s586, %s587
        %s589 = smul.addr %s588, 8
        %s590 = scalar_lea.vmem %s0, %s589
        %p591 = pneg %p68
        %p592 = pneg %p65
        %p593 = scmp.lt.s32.totalorder %s37, 1
        %s594 = scalar_select %p593, %s37, 1
        %s595 = smul.addr %s594, 2
        %s596 = smul.addr %s595, 4
        %s597 = scalar_lea.vmem %s1, %s596
        %p598 = pneg %p94
        %p599 = pneg %p91
        %p600 = scmp.lt.s32.totalorder %s37, 1
        %s601 = scalar_select %p600, %s37, 1
        %s602 = scalar_lea.vmem %s2, %s601
        %p603 = pneg %p120
        %p604 = pneg %p117
        %p605 = pneg %p141
        %p606 = pneg %p138
        %p607 = pneg %p162
        %p608 = pneg %p159
        %p609 = pneg %p183
        %p610 = pneg %p180
        %p611 = pneg %p204
        %p612 = pneg %p201
        %p613 = pneg %p225
        %p614 = pneg %p222
        %p615 = pneg %p246
        %p616 = pneg %p243
        %p617 = pneg %p267
        %p618 = pneg %p264
        %p619 = pneg %p288
        %p620 = pneg %p285
        %p621 = pneg %p309
        %p622 = pneg %p306
        %p623 = pneg %p330
        %p624 = pneg %p327
        %p625 = pneg %p351
        %p626 = pneg %p348
        %p627 = pneg %p372
        %p628 = pneg %p369
        %p629 = pneg %p393
        %p630 = pneg %p390
        %p631 = pneg %p414
        %p632 = pneg %p411
        %p633 = pneg %p435
        %p634 = pneg %p432
        %p635 = pneg %p456
        %p636 = pneg %p453
        %p637 = pneg %p484
        %p638 = pneg %p481
        %s639 = sand.u32 %s471, 1
        %s640 = scalar_lea.sflag [#allocation7], %s639
        %s641 = sand.u32 %s471, 1
        %s642 = smul.addr %s641, 8
        %s643 = scalar_lea.vmem [#allocation6], %s642
        %p644 = scmp.lt.s32.totalorder %s37, 1
        %s645 = scalar_select %p644, %s37, 1
        %p646 = scmp.lt.s32.totalorder %s38, 1
        %s647 = scalar_select %p646, %s38, 1
        %s648 = smul.addr %s645, 2
        %s649 = sadd.s32 %s647, %s648
        %s650 = smul.addr %s649, 8
        %s651 = scalar_lea.vmem %s0, %s650
        %p652 = scmp.lt.s32.totalorder %s37, 1
        %s653 = scalar_select %p652, %s37, 1
        %s654 = smul.addr %s653, 2
        %s655 = smul.addr %s654, 4
        %s656 = scalar_lea.vmem %s1, %s655
        %p657 = scmp.lt.s32.totalorder %s37, 1
        %s658 = scalar_select %p657, %s37, 1
        %s659 = scalar_lea.vmem %s2, %s658
        %v661 = vld [vmem:[%s3] sm:$0x1]
        %v662 = vld [vmem:[%s4] sm:$0x1]
        %p663 = scmp.eq.s32.totalorder %s38, 0
        // Predicated region
        $region97: #{_transformer_block_jit.1} parent=95 // pred_check
          %p664 = pneg %p663
        $region98: #{_transformer_block_jit.1} parent=95 // pred_check_branch
          %666 = sbr.rel (%p664) target = $region100
        $region99: #{_transformer_block_jit.1} parent=95 // pred_region
          %v667 = vld [vmem:[%s656] sm:$0xf]
          %v668 = vld [vmem:[%s656 + $0x4] sm:$0xf]
          %v669 = vunpack.c.l.bf16 %v667
          %v670 = vunpack.c.l.bf16 %v668
          %vm671 = vcmask 261120
          %v672 = vsel %vm671, %v669, 0.0
          %673 = vadd.xlane.f32.xlu0 %v672
          %v674 = vpop.xlane.xlu0 %673
          %v675 = vsel %vm671, %v670, 0.0
          %676 = vadd.xlane.f32.xlu0 %v675
          %v677 = vpop.xlane.xlu0 %676
          %v678 = vrcp.pop 32.0
          %v679 = vmul.f32 %v674, %v678
          %v680 = vmul.f32 %v677, %v678
          %v681 = vsub.f32 %v669, %v679
          %v682 = vsub.f32 %v670, %v680
          %v683 = vmul.f32 %v681, %v681
          %v684 = vmul.f32 %v682, %v682
          %v685 = vsel %vm671, %v683, 0.0
          %686 = vadd.xlane.f32.xlu0 %v685
          %v687 = vpop.xlane.xlu0 %686
          %v688 = vsel %vm671, %v684, 0.0
          %689 = vadd.xlane.f32.xlu0 %v688
          %v690 = vpop.xlane.xlu0 %689
          %v691 = vmul.f32 %v687, 0.032258064
          %v692 = vmul.f32 %v690, 0.032258064
          %v693 = vrsqrt.pop %v691
          %v694 = vmul.f32 %v691, %v693
          %vm695 = vcmp.eq.f32.partialorder %v691, inf
          %v696 = vsel %vm695, %v691, %v694
          %vm697 = vcmp.eq.f32.partialorder %v691, 0.0
          %v698 = vand.u32 %v691, 2147483648
          %v699 = vsel %vm697, %v698, %v696
          %v700 = vrsqrt.pop %v692
          %v701 = vmul.f32 %v692, %v700
          %vm702 = vcmp.eq.f32.partialorder %v692, inf
          %v703 = vsel %vm702, %v692, %v701
          %vm704 = vcmp.eq.f32.partialorder %v692, 0.0
          %v705 = vand.u32 %v692, 2147483648
          %v706 = vsel %vm704, %v705, %v703
          %v707 = vadd.f32 %v699, 1e-06
          %v708 = vadd.f32 %v706, 1e-06
          %v709 = vrcp.pop %v707
          %v710 = vrcp.pop %v708
          %v712 = vlaneseq
          %v713 = vshrl.u32 %v712, 7
          %v714 = vsub.s32 0, %v713
          %v715 = vrot.slane %v661, %v714
          %v717 = vmul.f32 %v715, %v681
          %v718 = vmul.f32 %v715, %v682
          %v719 = vmul.f32 %v717, %v709
          %v720 = vmul.f32 %v718, %v710
          %v722 = vlaneseq
          %v723 = vshrl.u32 %v722, 7
          %v724 = vsub.s32 0, %v723
          %v725 = vrot.slane %v662, %v724
          %v727 = vadd.f32 %v719, %v725
          %v728 = vadd.f32 %v720, %v725
          %v729 = vpack.c.bf16 %v728, %v727
          %v730 = vld [vmem:[%s7] sm:$0xf]
          %v731 = vld [vmem:[%s7 + $0x4] sm:$0xf]
          %v732 = vld [vmem:[%s7 + $0x8] sm:$0xf]
          %v733 = vld [vmem:[%s7 + $0xc] sm:$0xf]
          %v734 = vld [vmem:[%s8] sm:$0x1]
          %v736 = vlaneseq
          %v737 = vshrl.u32 %v736, 7
          %v738 = vsub.s32 0, %v737
          %v739 = vrot.slane %v734, %v738
          %v745 = vunpack.c.l.b16 %v730
          %v746 = vunpack.c.l.b16 %v731
          %v747 = vunpack.c.l.b16 %v732
          %v748 = vunpack.c.l.b16 %v733
          %v749 = vpack.c.b16 %v746, %v745
          %v750 = vpack.c.b16 %v748, %v747
          %v754 = vsel %vm671, %v729, 0
          %756 = vmatprep.subr.bf16.mxu0 0
          %757 = vmatpush1.bf16.msra.mxu0 0
          %758 = vmatprep.subr.bf16.mxu0 0
          %759 = vmatpush1.bf16.msra.mxu0 0
          %760 = vmatprep.subr.bf16.mxu0 0
          %761 = vmatpush1.bf16.msra.mxu0 0
          %762 = vmatprep.subr.bf16.mxu0 0
          %763 = vmatpush1.bf16.msra.mxu0 0
          %764 = vmatprep.subr.bf16.mxu0 0
          %765 = vmatpush1.bf16.msra.mxu0 0
          %766 = vmatprep.subr.bf16.mxu0 0
          %767 = vmatpush1.bf16.msra.mxu0 0
          %768 = vmatprep.subr.bf16.mxu0 0
          %769 = vmatpush1.bf16.msra.mxu0 %v750
          %770 = vmatprep.subr.bf16.mxu0 0
          %771 = vmatpush1.bf16.msra.mxu0 %v749
          %772 = vmatprep.subr.bf16.mxu0 0
          %773 = vmatpush2.bf16.msra.mxu0 0
          %774 = vmatprep.subr.bf16.mxu0 0
          %775 = vmatpush2.bf16.msra.mxu0 0
          %776 = vmatprep.subr.bf16.mxu0 0
          %777 = vmatpush2.bf16.msra.mxu0 0
          %778 = vmatprep.subr.bf16.mxu0 0
          %779 = vmatpush2.bf16.msra.mxu0 0
          %780 = vmatprep.subr.bf16.mxu0 0
          %781 = vmatpush2.bf16.msra.mxu0 0
          %782 = vmatprep.subr.bf16.mxu0 0
          %783 = vmatpush2.bf16.msra.mxu0 0
          %784 = vmatprep.subr.bf16.mxu0 0
          %785 = vmatpush2.bf16.msra.mxu0 0
          %786 = vmatprep.subr.bf16.mxu0 0
          %787 = vmatpush2.bf16.msra.mxu0 0
          %788 = vmatprep.mubr.bf16.mxu0 0
          %789 = vmatmul.mubr.bf16.gmra.mxu0 %v754
          %v790 = vpop.f32.mrf.mxu0
          %v791 = vadd.f32 %v739, %v790
          %v792 = vpop.f32.mrf.mxu0
          %v793 = vpop.f32.mrf.mxu0
          %v794 = vadd.f32 %v739, %v793
          %v795 = vpop.f32.mrf.mxu0
          %796 = vdwg.mxu0
          %v797 = vld [vmem:[%s9] sm:$0xf]
          %v798 = vld [vmem:[%s9 + $0x4] sm:$0xf]
          %v799 = vld [vmem:[%s9 + $0x8] sm:$0xf]
          %v800 = vld [vmem:[%s9 + $0xc] sm:$0xf]
          %v801 = vld [vmem:[%s10] sm:$0x1]
          %v803 = vlaneseq
          %v804 = vshrl.u32 %v803, 7
          %v805 = vsub.s32 0, %v804
          %v806 = vrot.slane %v801, %v805
          %v812 = vunpack.c.l.b16 %v797
          %v813 = vunpack.c.l.b16 %v798
          %v814 = vunpack.c.l.b16 %v799
          %v815 = vunpack.c.l.b16 %v800
          %v816 = vpack.c.b16 %v813, %v812
          %v817 = vpack.c.b16 %v815, %v814
          %820 = vmatprep.subr.bf16.mxu0 0
          %821 = vmatpush1.bf16.msra.mxu0 0
          %822 = vmatprep.subr.bf16.mxu0 0
          %823 = vmatpush1.bf16.msra.mxu0 0
          %824 = vmatprep.subr.bf16.mxu0 0
          %825 = vmatpush1.bf16.msra.mxu0 0
          %826 = vmatprep.subr.bf16.mxu0 0
          %827 = vmatpush1.bf16.msra.mxu0 0
          %828 = vmatprep.subr.bf16.mxu0 0
          %829 = vmatpush1.bf16.msra.mxu0 0
          %830 = vmatprep.subr.bf16.mxu0 0
          %831 = vmatpush1.bf16.msra.mxu0 0
          %832 = vmatprep.subr.bf16.mxu0 0
          %833 = vmatpush1.bf16.msra.mxu0 %v817
          %834 = vmatprep.subr.bf16.mxu0 0
          %835 = vmatpush1.bf16.msra.mxu0 %v816
          %836 = vmatprep.subr.bf16.mxu0 0
          %837 = vmatpush2.bf16.msra.mxu0 0
          %838 = vmatprep.subr.bf16.mxu0 0
          %839 = vmatpush2.bf16.msra.mxu0 0
          %840 = vmatprep.subr.bf16.mxu0 0
          %841 = vmatpush2.bf16.msra.mxu0 0
          %842 = vmatprep.subr.bf16.mxu0 0
          %843 = vmatpush2.bf16.msra.mxu0 0
          %844 = vmatprep.subr.bf16.mxu0 0
          %845 = vmatpush2.bf16.msra.mxu0 0
          %846 = vmatprep.subr.bf16.mxu0 0
          %847 = vmatpush2.bf16.msra.mxu0 0
          %848 = vmatprep.subr.bf16.mxu0 0
          %849 = vmatpush2.bf16.msra.mxu0 0
          %850 = vmatprep.subr.bf16.mxu0 0
          %851 = vmatpush2.bf16.msra.mxu0 0
          %852 = vmatprep.mubr.bf16.mxu0 0
          %853 = vmatmul.mubr.bf16.gmra.mxu0 %v754
          %v854 = vpop.f32.mrf.mxu0
          %v855 = vadd.f32 %v806, %v854
          %v856 = vpop.f32.mrf.mxu0
          %v857 = vpop.f32.mrf.mxu0
          %v858 = vadd.f32 %v806, %v857
          %v859 = vpop.f32.mrf.mxu0
          %860 = vdwg.mxu0
          %v861 = vpack.c.bf16 %v794, %v791
          %v863 = vunpack.c.l.b16 %v861
          %v864 = vunpack.c.h.b16 %v861
          %v865 = vpack.c.b16 %v863, %v863
          %v866 = vpack.c.b16 %v864, %v864
          %vm869 = vcmask 257024
          %870 = vst.msk [vmem:[#allocation3] sm:$0xf] %vm869, %v865
          %871 = vst.msk [vmem:[#allocation3 + $0x4] sm:$0xf] %vm869, %v866
          %v872 = vpack.c.bf16 %v858, %v855
          %v874 = vunpack.c.l.b16 %v872
          %v875 = vunpack.c.h.b16 %v872
          %v876 = vpack.c.b16 %v874, %v874
          %v877 = vpack.c.b16 %v875, %v875
          %880 = vst.msk [vmem:[#allocation4] sm:$0xf] %vm869, %v876
          %881 = vst.msk [vmem:[#allocation4 + $0x4] sm:$0xf] %vm869, %v877
        $region100: #{_transformer_block_jit.1} parent=95 // pred_fallthru
          _
        %v882 = vld [vmem:[%s651] sm:$0xff]
        %vm883 = vcmask 261120
        %v884 = vsel %vm883, %v882, 0.0
        %885 = vadd.xlane.f32.xlu0 %v884
        %v886 = vpop.xlane.xlu0 %885
        %v887 = vrcp.pop 32.0
        %v888 = vmul.f32 %v886, %v887
        %v889 = vsub.f32 %v882, %v888
        %v890 = vmul.f32 %v889, %v889
        %v891 = vsel %vm883, %v890, 0.0
        %892 = vadd.xlane.f32.xlu0 %v891
        %v893 = vpop.xlane.xlu0 %892
        %v894 = vmul.f32 %v893, 0.032258064
        %v895 = vrsqrt.pop %v894
        %v896 = vmul.f32 %v894, %v895
        %vm897 = vcmp.eq.f32.partialorder %v894, inf
        %v898 = vsel %vm897, %v894, %v896
        %vm899 = vcmp.eq.f32.partialorder %v894, 0.0
        %v900 = vand.u32 %v894, 2147483648
        %v901 = vsel %vm899, %v900, %v898
        %v902 = vadd.f32 %v901, 1e-06
        %v903 = vrcp.pop %v902
        %v905 = vlaneseq
        %v906 = vshrl.u32 %v905, 7
        %v907 = vsub.s32 0, %v906
        %v908 = vrot.slane %v661, %v907
        %v910 = vmul.f32 %v908, %v889
        %v911 = vmul.f32 %v910, %v903
        %v913 = vlaneseq
        %v914 = vshrl.u32 %v913, 7
        %v915 = vsub.s32 0, %v914
        %v916 = vrot.slane %v662, %v915
        %v918 = vadd.f32 %v911, %v916
        %v919 = vpack.c.bf16 %v918, %v918
        %v920 = vld [vmem:[%s5] sm:$0xf]
        %v921 = vld [vmem:[%s5 + $0x4] sm:$0xf]
        %v922 = vld [vmem:[%s5 + $0x8] sm:$0xf]
        %v923 = vld [vmem:[%s5 + $0xc] sm:$0xf]
        %v924 = vld [vmem:[%s6] sm:$0x1]
        %v926 = vlaneseq
        %v927 = vshrl.u32 %v926, 7
        %v928 = vsub.s32 0, %v927
        %v929 = vrot.slane %v924, %v928
        %v935 = vunpack.c.l.b16 %v920
        %v936 = vunpack.c.l.b16 %v921
        %v937 = vunpack.c.l.b16 %v922
        %v938 = vunpack.c.l.b16 %v923
        %v939 = vpack.c.b16 %v936, %v935
        %v940 = vpack.c.b16 %v938, %v937
        %v944 = vsel %vm883, %v919, 0
        %946 = vmatprep.subr.bf16.mxu0 0
        %947 = vmatpush1.bf16.msra.mxu0 0
        %948 = vmatprep.subr.bf16.mxu0 0
        %949 = vmatpush1.bf16.msra.mxu0 0
        %950 = vmatprep.subr.bf16.mxu0 0
        %951 = vmatpush1.bf16.msra.mxu0 0
        %952 = vmatprep.subr.bf16.mxu0 0
        %953 = vmatpush1.bf16.msra.mxu0 0
        %954 = vmatprep.subr.bf16.mxu0 0
        %955 = vmatpush1.bf16.msra.mxu0 0
        %956 = vmatprep.subr.bf16.mxu0 0
        %957 = vmatpush1.bf16.msra.mxu0 0
        %958 = vmatprep.subr.bf16.mxu0 0
        %959 = vmatpush1.bf16.msra.mxu0 %v940
        %960 = vmatprep.subr.bf16.mxu0 0
        %961 = vmatpush1.bf16.msra.mxu0 %v939
        %962 = vmatprep.subr.bf16.mxu0 0
        %963 = vmatpush2.bf16.msra.mxu0 0
        %964 = vmatprep.subr.bf16.mxu0 0
        %965 = vmatpush2.bf16.msra.mxu0 0
        %966 = vmatprep.subr.bf16.mxu0 0
        %967 = vmatpush2.bf16.msra.mxu0 0
        %968 = vmatprep.subr.bf16.mxu0 0
        %969 = vmatpush2.bf16.msra.mxu0 0
        %970 = vmatprep.subr.bf16.mxu0 0
        %971 = vmatpush2.bf16.msra.mxu0 0
        %972 = vmatprep.subr.bf16.mxu0 0
        %973 = vmatpush2.bf16.msra.mxu0 0
        %974 = vmatprep.subr.bf16.mxu0 0
        %975 = vmatpush2.bf16.msra.mxu0 0
        %976 = vmatprep.subr.bf16.mxu0 0
        %977 = vmatpush2.bf16.msra.mxu0 0
        %978 = vmatprep.mubr.bf16.mxu0 0
        %979 = vmatmul.mubr.bf16.gmra.mxu0 %v944
        %v980 = vpop.f32.mrf.mxu0
        %v981 = vadd.f32 %v929, %v980
        %v982 = vpop.f32.mrf.mxu0
        %v983 = vpop.f32.mrf.mxu0
        %v984 = vpop.f32.mrf.mxu0
        %985 = vdwg.mxu0
        %v986 = vmul.f32 %v981, 0.35355338
        %v987 = vpack.c.bf16 %v986, %v986
        %vm988 = vcmask 257024
        %989 = vst.msk [vmem:[#allocation2] sm:$0xf] %vm988, %v987
        %v990 = vld [vmem:[%s659] sm:$0x1]
        %vm991 = vcmp.eq.f32.partialorder %v990, 0.0
        %v992 = vsel %vm991, -1e+09, 0.0
        %v993 = vld [vmem:[#allocation2] sm:$0xf]
        %v994 = vld [vmem:[#allocation3] sm:$0xf]
        %v995 = vld [vmem:[#allocation3 + $0x4] sm:$0xf]
        %v996 = vld [vmem:[#allocation4] sm:$0xf]
        %v997 = vld [vmem:[#allocation4 + $0x4] sm:$0xf]
        %v999 = vlaneseq
        %v1000 = vshrl.u32 %v999, 7
        %v1001 = vsub.s32 0, %v1000
        %v1002 = vrot.slane %v992, %v1001
        %v1006 = vunpack.c.l.b16 %v994
        %v1007 = vunpack.c.l.b16 %v995
        %v1008 = vpack.c.b16 %v1007, %v1006
        %vm1009 = vcmask 64512
        %v1011 = vsel %vm1009, %v993, 0
        %v1014 = vsel %vm1009, %v1008, 0
        %1016 = vmatprep.subr.bf16.mxu0 0
        %1017 = vmatpush1.bf16.xpose.msra.mxu0 0
        %1018 = vmatprep.subr.bf16.mxu0 0
        %1019 = vmatpush1.bf16.xpose.msra.mxu0 0
        %1020 = vmatprep.subr.bf16.mxu0 0
        %1021 = vmatpush1.bf16.xpose.msra.mxu0 0
        %1022 = vmatprep.subr.bf16.mxu0 0
        %1023 = vmatpush1.bf16.xpose.msra.mxu0 0
        %1024 = vmatprep.subr.bf16.mxu0 0
        %1025 = vmatpush1.bf16.xpose.msra.mxu0 0
        %1026 = vmatprep.subr.bf16.mxu0 0
        %1027 = vmatpush1.bf16.xpose.msra.mxu0 0
        %1028 = vmatprep.subr.bf16.mxu0 0
        %1029 = vmatpush1.bf16.xpose.msra.mxu0 0
        %1030 = vmatprep.subr.bf16.mxu0 0
        %1031 = vmatpush1.bf16.xpose.msra.mxu0 %v1014
        %1032 = vmatprep.subr.bf16.mxu0 0
        %1033 = vmatpush2.bf16.xpose.msra.mxu0 0
        %1034 = vmatprep.subr.bf16.mxu0 0
        %1035 = vmatpush2.bf16.xpose.msra.mxu0 0
        %1036 = vmatprep.subr.bf16.mxu0 0
        %1037 = vmatpush2.bf16.xpose.msra.mxu0 0
        %1038 = vmatprep.subr.bf16.mxu0 0
        %1039 = vmatpush2.bf16.xpose.msra.mxu0 0
        %1040 = vmatprep.subr.bf16.mxu0 0
        %1041 = vmatpush2.bf16.xpose.msra.mxu0 0
        %1042 = vmatprep.subr.bf16.mxu0 0
        %1043 = vmatpush2.bf16.xpose.msra.mxu0 0
        %1044 = vmatprep.subr.bf16.mxu0 0
        %1045 = vmatpush2.bf16.xpose.msra.mxu0 0
        %1046 = vmatprep.subr.bf16.mxu0 0
        %1047 = vmatpush2.bf16.xpose.msra.mxu0 0
        %1048 = vmatprep.mubr.bf16.mxu0 0
        %1049 = vmatmul.mubr.bf16.gmra.mxu0 %v1011
        %v1050 = vpop.f32.mrf.mxu0
        %v1051 = vadd.f32 %v1002, %v1050
        %v1052 = vpop.f32.mrf.mxu0
        %v1053 = vpop.f32.mrf.mxu0
        %v1054 = vpop.f32.mrf.mxu0
        %1055 = vdwg.mxu0
        %vm1056 = vcmask 130048
        %v1057 = vsel %vm1056, %v1051, -inf
        %1058 = vmax.xlane.f32.xlu0 %v1057
        %v1059 = vpop.xlane.xlu0 %1058
        %v1060 = vsub.f32 %v1051, %v1059
        %v1061 = vmul.f32 %v1060, 1.442695
        %v1062 = vpow.pop %v1061
        %v1063 = vsel %vm1056, %v1062, 0.0
        %1064 = vadd.xlane.f32.xlu0 %v1063
        %v1065 = vpop.xlane.xlu0 %1064
        %v1066 = vrcp.pop %v1065
        %v1067 = vmul.f32 %v1062, %v1066
        %v1068 = vpack.c.bf16 %v1067, %v1067
        %v1071 = vunpack.c.l.b16 %v996
        %v1072 = vunpack.c.l.b16 %v997
        %v1073 = vpack.c.b16 %v1072, %v1071
        %v1076 = vsel %vm1056, %v1068, 0
        %1078 = vmatprep.subr.bf16.mxu0 0
        %1079 = vmatpush1.bf16.msra.mxu0 0
        %1080 = vmatprep.subr.bf16.mxu0 0
        %1081 = vmatpush1.bf16.msra.mxu0 0
        %1082 = vmatprep.subr.bf16.mxu0 0
        %1083 = vmatpush1.bf16.msra.mxu0 0
        %1084 = vmatprep.subr.bf16.mxu0 0
        %1085 = vmatpush1.bf16.msra.mxu0 0
        %1086 = vmatprep.subr.bf16.mxu0 0
        %1087 = vmatpush1.bf16.msra.mxu0 0
        %1088 = vmatprep.subr.bf16.mxu0 0
        %1089 = vmatpush1.bf16.msra.mxu0 0
        %1090 = vmatprep.subr.bf16.mxu0 0
        %1091 = vmatpush1.bf16.msra.mxu0 0
        %1092 = vmatprep.subr.bf16.mxu0 0
        %1093 = vmatpush1.bf16.msra.mxu0 %v1073
        %1094 = vmatprep.subr.bf16.mxu0 0
        %1095 = vmatpush2.bf16.msra.mxu0 0
        %1096 = vmatprep.subr.bf16.mxu0 0
        %1097 = vmatpush2.bf16.msra.mxu0 0
        %1098 = vmatprep.subr.bf16.mxu0 0
        %1099 = vmatpush2.bf16.msra.mxu0 0
        %1100 = vmatprep.subr.bf16.mxu0 0
        %1101 = vmatpush2.bf16.msra.mxu0 0
        %1102 = vmatprep.subr.bf16.mxu0 0
        %1103 = vmatpush2.bf16.msra.mxu0 0
        %1104 = vmatprep.subr.bf16.mxu0 0
        %1105 = vmatpush2.bf16.msra.mxu0 0
        %1106 = vmatprep.subr.bf16.mxu0 0
        %1107 = vmatpush2.bf16.msra.mxu0 0
        %1108 = vmatprep.subr.bf16.mxu0 0
        %1109 = vmatpush2.bf16.msra.mxu0 0
        %1110 = vmatprep.mubr.bf16.mxu0 0
        %1111 = vmatmul.mubr.bf16.gmra.mxu0 %v1076
        %v1112 = vpop.f32.mrf.mxu0
        %v1113 = vadd.f32 0.0, %v1112
        %v1114 = vpop.f32.mrf.mxu0
        %v1115 = vpop.f32.mrf.mxu0
        %v1116 = vpop.f32.mrf.mxu0
        %1117 = vdwg.mxu0
        %v1118 = vpack.c.bf16 %v1113, %v1113
        %vm1119 = vcmask 60416
        %1120 = vst.msk [vmem:[#allocation5] sm:$0xf] %vm1119, %v1118
        %v1121 = vld [vmem:[#allocation2] sm:$0xf]
        %v1122 = vld [vmem:[#allocation3] sm:$0xf]
        %v1123 = vld [vmem:[#allocation3 + $0x4] sm:$0xf]
        %v1124 = vld [vmem:[#allocation4] sm:$0xf]
        %v1125 = vld [vmem:[#allocation4 + $0x4] sm:$0xf]
        %v1127 = vunpack.c.l.b16 %v1121
        %v1128 = vpack.c.b16 %v1127, %v1127
        %1129 = vrot.lane.b32.xlu0 %v1128, 120
        %v1130 = vpop.permute.xlu0 %1129
        %v1133 = vunpack.c.l.b16 %v1122
        %v1134 = vunpack.c.l.b16 %v1123
        %v1135 = vpack.c.b16 %v1134, %v1133
        %1136 = vrot.lane.b32.xlu0 %v1135, 120
        %v1137 = vpop.permute.xlu0 %1136
        %v1139 = vsel %vm1009, %v1130, 0
        %v1142 = vsel %vm1009, %v1137, 0
        %1144 = vmatprep.subr.bf16.mxu0 0
        %1145 = vmatpush1.bf16.xpose.msra.mxu0 0
        %1146 = vmatprep.subr.bf16.mxu0 0
        %1147 = vmatpush1.bf16.xpose.msra.mxu0 0
        %1148 = vmatprep.subr.bf16.mxu0 0
        %1149 = vmatpush1.bf16.xpose.msra.mxu0 0
        %1150 = vmatprep.subr.bf16.mxu0 0
        %1151 = vmatpush1.bf16.xpose.msra.mxu0 0
        %1152 = vmatprep.subr.bf16.mxu0 0
        %1153 = vmatpush1.bf16.xpose.msra.mxu0 0
        %1154 = vmatprep.subr.bf16.mxu0 0
        %1155 = vmatpush1.bf16.xpose.msra.mxu0 0
        %1156 = vmatprep.subr.bf16.mxu0 0
        %1157 = vmatpush1.bf16.xpose.msra.mxu0 0
        %1158 = vmatprep.subr.bf16.mxu0 0
        %1159 = vmatpush1.bf16.xpose.msra.mxu0 %v1142
        %1160 = vmatprep.subr.bf16.mxu0 0
        %1161 = vmatpush2.bf16.xpose.msra.mxu0 0
        %1162 = vmatprep.subr.bf16.mxu0 0
        %1163 = vmatpush2.bf16.xpose.msra.mxu0 0
        %1164 = vmatprep.subr.bf16.mxu0 0
        %1165 = vmatpush2.bf16.xpose.msra.mxu0 0
        %1166 = vmatprep.subr.bf16.mxu0 0
        %1167 = vmatpush2.bf16.xpose.msra.mxu0 0
        %1168 = vmatprep.subr.bf16.mxu0 0
        %1169 = vmatpush2.bf16.xpose.msra.mxu0 0
        %1170 = vmatprep.subr.bf16.mxu0 0
        %1171 = vmatpush2.bf16.xpose.msra.mxu0 0
        %1172 = vmatprep.subr.bf16.mxu0 0
        %1173 = vmatpush2.bf16.xpose.msra.mxu0 0
        %1174 = vmatprep.subr.bf16.mxu0 0
        %1175 = vmatpush2.bf16.xpose.msra.mxu0 0
        %1176 = vmatprep.mubr.bf16.mxu0 0
        %1177 = vmatmul.mubr.bf16.gmra.mxu0 %v1139
        %v1178 = vpop.f32.mrf.mxu0
        %v1179 = vadd.f32 %v1002, %v1178
        %v1180 = vpop.f32.mrf.mxu0
        %v1181 = vpop.f32.mrf.mxu0
        %v1182 = vpop.f32.mrf.mxu0
        %1183 = vdwg.mxu0
        %v1184 = vsel %vm1056, %v1179, -inf
        %1185 = vmax.xlane.f32.xlu0 %v1184
        %v1186 = vpop.xlane.xlu0 %1185
        %v1187 = vsub.f32 %v1179, %v1186
        %v1188 = vmul.f32 %v1187, 1.442695
        %v1189 = vpow.pop %v1188
        %v1190 = vsel %vm1056, %v1189, 0.0
        %1191 = vadd.xlane.f32.xlu0 %v1190
        %v1192 = vpop.xlane.xlu0 %1191
        %v1193 = vrcp.pop %v1192
        %v1194 = vmul.f32 %v1189, %v1193
        %v1195 = vpack.c.bf16 %v1194, %v1194
        %v1198 = vunpack.c.l.b16 %v1124
        %v1199 = vunpack.c.l.b16 %v1125
        %v1200 = vpack.c.b16 %v1199, %v1198
        %1201 = vrot.lane.b32.xlu0 %v1200, 120
        %v1202 = vpop.permute.xlu0 %1201
        %v1205 = vsel %vm1056, %v1195, 0
        %1207 = vmatprep.subr.bf16.mxu0 0
        %1208 = vmatpush1.bf16.msra.mxu0 0
        %1209 = vmatprep.subr.bf16.mxu0 0
        %1210 = vmatpush1.bf16.msra.mxu0 0
        %1211 = vmatprep.subr.bf16.mxu0 0
        %1212 = vmatpush1.bf16.msra.mxu0 0
        %1213 = vmatprep.subr.bf16.mxu0 0
        %1214 = vmatpush1.bf16.msra.mxu0 0
        %1215 = vmatprep.subr.bf16.mxu0 0
        %1216 = vmatpush1.bf16.msra.mxu0 0
        %1217 = vmatprep.subr.bf16.mxu0 0
        %1218 = vmatpush1.bf16.msra.mxu0 0
        %1219 = vmatprep.subr.bf16.mxu0 0
        %1220 = vmatpush1.bf16.msra.mxu0 0
        %1221 = vmatprep.subr.bf16.mxu0 0
        %1222 = vmatpush1.bf16.msra.mxu0 %v1202
        %1223 = vmatprep.subr.bf16.mxu0 0
        %1224 = vmatpush2.bf16.msra.mxu0 0
        %1225 = vmatprep.subr.bf16.mxu0 0
        %1226 = vmatpush2.bf16.msra.mxu0 0
        %1227 = vmatprep.subr.bf16.mxu0 0
        %1228 = vmatpush2.bf16.msra.mxu0 0
        %1229 = vmatprep.subr.bf16.mxu0 0
        %1230 = vmatpush2.bf16.msra.mxu0 0
        %1231 = vmatprep.subr.bf16.mxu0 0
        %1232 = vmatpush2.bf16.msra.mxu0 0
        %1233 = vmatprep.subr.bf16.mxu0 0
        %1234 = vmatpush2.bf16.msra.mxu0 0
        %1235 = vmatprep.subr.bf16.mxu0 0
        %1236 = vmatpush2.bf16.msra.mxu0 0
        %1237 = vmatprep.subr.bf16.mxu0 0
        %1238 = vmatpush2.bf16.msra.mxu0 0
        %1239 = vmatprep.mubr.bf16.mxu0 0
        %1240 = vmatmul.mubr.bf16.gmra.mxu0 %v1205
        %v1241 = vpop.f32.mrf.mxu0
        %v1242 = vadd.f32 0.0, %v1241
        %v1243 = vpop.f32.mrf.mxu0
        %v1244 = vpop.f32.mrf.mxu0
        %v1245 = vpop.f32.mrf.mxu0
        %1246 = vdwg.mxu0
        %v1247 = vpack.c.bf16 %v1242, %v1242
        %v1249 = vunpack.c.l.b16 %v1247
        %v1250 = vpack.c.b16 %v1249, %v1249
        %1251 = vrot.lane.b32.xlu0 %v1250, 8
        %v1252 = vpop.permute.xlu0 %1251
        %vm1254 = vcmask 126016
        %1255 = vst.msk [vmem:[#allocation5] sm:$0xf] %vm1254, %v1252
        %v1256 = vld [vmem:[#allocation2] sm:$0xf]
        %v1257 = vld [vmem:[#allocation3] sm:$0xf]
        %v1258 = vld [vmem:[#allocation3 + $0x4] sm:$0xf]
        %v1259 = vld [vmem:[#allocation4] sm:$0xf]
        %v1260 = vld [vmem:[#allocation4 + $0x4] sm:$0xf]
        %v1262 = vunpack.c.l.b16 %v1256
        %v1263 = vpack.c.b16 %v1262, %v1262
        %1264 = vrot.lane.b32.xlu0 %v1263, 112
        %v1265 = vpop.permute.xlu0 %1264
        %v1268 = vunpack.c.l.b16 %v1257
        %v1269 = vunpack.c.l.b16 %v1258
        %v1270 = vpack.c.b16 %v1269, %v1268
        %1271 = vrot.lane.b32.xlu0 %v1270, 112
        %v1272 = vpop.permute.xlu0 %1271
        %v1274 = vsel %vm1009, %v1265, 0
        %v1277 = vsel %vm1009, %v1272, 0
        %1279 = vmatprep.subr.bf16.mxu0 0
        %1280 = vmatpush1.bf16.xpose.msra.mxu0 0
        %1281 = vmatprep.subr.bf16.mxu0 0
        %1282 = vmatpush1.bf16.xpose.msra.mxu0 0
        %1283 = vmatprep.subr.bf16.mxu0 0
        %1284 = vmatpush1.bf16.xpose.msra.mxu0 0
        %1285 = vmatprep.subr.bf16.mxu0 0
        %1286 = vmatpush1.bf16.xpose.msra.mxu0 0
        %1287 = vmatprep.subr.bf16.mxu0 0
        %1288 = vmatpush1.bf16.xpose.msra.mxu0 0
        %1289 = vmatprep.subr.bf16.mxu0 0
        %1290 = vmatpush1.bf16.xpose.msra.mxu0 0
        %1291 = vmatprep.subr.bf16.mxu0 0
        %1292 = vmatpush1.bf16.xpose.msra.mxu0 0
        %1293 = vmatprep.subr.bf16.mxu0 0
        %1294 = vmatpush1.bf16.xpose.msra.mxu0 %v1277
        %1295 = vmatprep.subr.bf16.mxu0 0
        %1296 = vmatpush2.bf16.xpose.msra.mxu0 0
        %1297 = vmatprep.subr.bf16.mxu0 0
        %1298 = vmatpush2.bf16.xpose.msra.mxu0 0
        %1299 = vmatprep.subr.bf16.mxu0 0
        %1300 = vmatpush2.bf16.xpose.msra.mxu0 0
        %1301 = vmatprep.subr.bf16.mxu0 0
        %1302 = vmatpush2.bf16.xpose.msra.mxu0 0
        %1303 = vmatprep.subr.bf16.mxu0 0
        %1304 = vmatpush2.bf16.xpose.msra.mxu0 0
        %1305 = vmatprep.subr.bf16.mxu0 0
        %1306 = vmatpush2.bf16.xpose.msra.mxu0 0
        %1307 = vmatprep.subr.bf16.mxu0 0
        %1308 = vmatpush2.bf16.xpose.msra.mxu0 0
        %1309 = vmatprep.subr.bf16.mxu0 0
        %1310 = vmatpush2.bf16.xpose.msra.mxu0 0
        %1311 = vmatprep.mubr.bf16.mxu0 0
        %1312 = vmatmul.mubr.bf16.gmra.mxu0 %v1274
        %v1313 = vpop.f32.mrf.mxu0
        %v1314 = vadd.f32 %v1002, %v1313
        %v1315 = vpop.f32.mrf.mxu0
        %v1316 = vpop.f32.mrf.mxu0
        %v1317 = vpop.f32.mrf.mxu0
        %1318 = vdwg.mxu0
        %v1319 = vsel %vm1056, %v1314, -inf
        %1320 = vmax.xlane.f32.xlu0 %v1319
        %v1321 = vpop.xlane.xlu0 %1320
        %v1322 = vsub.f32 %v1314, %v1321
        %v1323 = vmul.f32 %v1322, 1.442695
        %v1324 = vpow.pop %v1323
        %v1325 = vsel %vm1056, %v1324, 0.0
        %1326 = vadd.xlane.f32.xlu0 %v1325
        %v1327 = vpop.xlane.xlu0 %1326
        %v1328 = vrcp.pop %v1327
        %v1329 = vmul.f32 %v1324, %v1328
        %v1330 = vpack.c.bf16 %v1329, %v1329
        %v1333 = vunpack.c.l.b16 %v1259
        %v1334 = vunpack.c.l.b16 %v1260
        %v1335 = vpack.c.b16 %v1334, %v1333
        %1336 = vrot.lane.b32.xlu0 %v1335, 112
        %v1337 = vpop.permute.xlu0 %1336
        %v1340 = vsel %vm1056, %v1330, 0
        %1342 = vmatprep.subr.bf16.mxu0 0
        %1343 = vmatpush1.bf16.msra.mxu0 0
        %1344 = vmatprep.subr.bf16.mxu0 0
        %1345 = vmatpush1.bf16.msra.mxu0 0
        %1346 = vmatprep.subr.bf16.mxu0 0
        %1347 = vmatpush1.bf16.msra.mxu0 0
        %1348 = vmatprep.subr.bf16.mxu0 0
        %1349 = vmatpush1.bf16.msra.mxu0 0
        %1350 = vmatprep.subr.bf16.mxu0 0
        %1351 = vmatpush1.bf16.msra.mxu0 0
        %1352 = vmatprep.subr.bf16.mxu0 0
        %1353 = vmatpush1.bf16.msra.mxu0 0
        %1354 = vmatprep.subr.bf16.mxu0 0
        %1355 = vmatpush1.bf16.msra.mxu0 0
        %1356 = vmatprep.subr.bf16.mxu0 0
        %1357 = vmatpush1.bf16.msra.mxu0 %v1337
        %1358 = vmatprep.subr.bf16.mxu0 0
        %1359 = vmatpush2.bf16.msra.mxu0 0
        %1360 = vmatprep.subr.bf16.mxu0 0
        %1361 = vmatpush2.bf16.msra.mxu0 0
        %1362 = vmatprep.subr.bf16.mxu0 0
        %1363 = vmatpush2.bf16.msra.mxu0 0
        %1364 = vmatprep.subr.bf16.mxu0 0
        %1365 = vmatpush2.bf16.msra.mxu0 0
        %1366 = vmatprep.subr.bf16.mxu0 0
        %1367 = vmatpush2.bf16.msra.mxu0 0
        %1368 = vmatprep.subr.bf16.mxu0 0
        %1369 = vmatpush2.bf16.msra.mxu0 0
        %1370 = vmatprep.subr.bf16.mxu0 0
        %1371 = vmatpush2.bf16.msra.mxu0 0
        %1372 = vmatprep.subr.bf16.mxu0 0
        %1373 = vmatpush2.bf16.msra.mxu0 0
        %1374 = vmatprep.mubr.bf16.mxu0 0
        %1375 = vmatmul.mubr.bf16.gmra.mxu0 %v1340
        %v1376 = vpop.f32.mrf.mxu0
        %v1377 = vadd.f32 0.0, %v1376
        %v1378 = vpop.f32.mrf.mxu0
        %v1379 = vpop.f32.mrf.mxu0
        %v1380 = vpop.f32.mrf.mxu0
        %1381 = vdwg.mxu0
        %v1382 = vpack.c.bf16 %v1377, %v1377
        %v1384 = vunpack.c.l.b16 %v1382
        %v1385 = vpack.c.b16 %v1384, %v1384
        %1386 = vrot.lane.b32.xlu0 %v1385, 16
        %v1387 = vpop.permute.xlu0 %1386
        %vm1389 = vcmask 191616
        %1390 = vst.msk [vmem:[#allocation5] sm:$0xf] %vm1389, %v1387
        %v1391 = vld [vmem:[#allocation2] sm:$0xf]
        %v1392 = vld [vmem:[#allocation3] sm:$0xf]
        %v1393 = vld [vmem:[#allocation3 + $0x4] sm:$0xf]
        %v1394 = vld [vmem:[#allocation4] sm:$0xf]
        %v1395 = vld [vmem:[#allocation4 + $0x4] sm:$0xf]
        %v1397 = vunpack.c.l.b16 %v1391
        %v1398 = vpack.c.b16 %v1397, %v1397
        %1399 = vrot.lane.b32.xlu0 %v1398, 104
        %v1400 = vpop.permute.xlu0 %1399
        %v1403 = vunpack.c.l.b16 %v1392
        %v1404 = vunpack.c.l.b16 %v1393
        %v1405 = vpack.c.b16 %v1404, %v1403
        %1406 = vrot.lane.b32.xlu0 %v1405, 104
        %v1407 = vpop.permute.xlu0 %1406
        %v1409 = vsel %vm1009, %v1400, 0
        %v1412 = vsel %vm1009, %v1407, 0
        %1414 = vmatprep.subr.bf16.mxu0 0
        %1415 = vmatpush1.bf16.xpose.msra.mxu0 0
        %1416 = vmatprep.subr.bf16.mxu0 0
        %1417 = vmatpush1.bf16.xpose.msra.mxu0 0
        %1418 = vmatprep.subr.bf16.mxu0 0
        %1419 = vmatpush1.bf16.xpose.msra.mxu0 0
        %1420 = vmatprep.subr.bf16.mxu0 0
        %1421 = vmatpush1.bf16.xpose.msra.mxu0 0
        %1422 = vmatprep.subr.bf16.mxu0 0
        %1423 = vmatpush1.bf16.xpose.msra.mxu0 0
        %1424 = vmatprep.subr.bf16.mxu0 0
        %1425 = vmatpush1.bf16.xpose.msra.mxu0 0
        %1426 = vmatprep.subr.bf16.mxu0 0
        %1427 = vmatpush1.bf16.xpose.msra.mxu0 0
        %1428 = vmatprep.subr.bf16.mxu0 0
        %1429 = vmatpush1.bf16.xpose.msra.mxu0 %v1412
        %1430 = vmatprep.subr.bf16.mxu0 0
        %1431 = vmatpush2.bf16.xpose.msra.mxu0 0
        %1432 = vmatprep.subr.bf16.mxu0 0
        %1433 = vmatpush2.bf16.xpose.msra.mxu0 0
        %1434 = vmatprep.subr.bf16.mxu0 0
        %1435 = vmatpush2.bf16.xpose.msra.mxu0 0
        %1436 = vmatprep.subr.bf16.mxu0 0
        %1437 = vmatpush2.bf16.xpose.msra.mxu0 0
        %1438 = vmatprep.subr.bf16.mxu0 0
        %1439 = vmatpush2.bf16.xpose.msra.mxu0 0
        %1440 = vmatprep.subr.bf16.mxu0 0
        %1441 = vmatpush2.bf16.xpose.msra.mxu0 0
        %1442 = vmatprep.subr.bf16.mxu0 0
        %1443 = vmatpush2.bf16.xpose.msra.mxu0 0
        %1444 = vmatprep.subr.bf16.mxu0 0
        %1445 = vmatpush2.bf16.xpose.msra.mxu0 0
        %1446 = vmatprep.mubr.bf16.mxu0 0
        %1447 = vmatmul.mubr.bf16.gmra.mxu0 %v1409
        %v1448 = vpop.f32.mrf.mxu0
        %v1449 = vadd.f32 %v1002, %v1448
        %v1450 = vpop.f32.mrf.mxu0
        %v1451 = vpop.f32.mrf.mxu0
        %v1452 = vpop.f32.mrf.mxu0
        %1453 = vdwg.mxu0
        %v1454 = vsel %vm1056, %v1449, -inf
        %1455 = vmax.xlane.f32.xlu0 %v1454
        %v1456 = vpop.xlane.xlu0 %1455
        %v1457 = vsub.f32 %v1449, %v1456
        %v1458 = vmul.f32 %v1457, 1.442695
        %v1459 = vpow.pop %v1458
        %v1460 = vsel %vm1056, %v1459, 0.0
        %1461 = vadd.xlane.f32.xlu0 %v1460
        %v1462 = vpop.xlane.xlu0 %1461
        %v1463 = vrcp.pop %v1462
        %v1464 = vmul.f32 %v1459, %v1463
        %v1465 = vpack.c.bf16 %v1464, %v1464
        %v1468 = vunpack.c.l.b16 %v1394
        %v1469 = vunpack.c.l.b16 %v1395
        %v1470 = vpack.c.b16 %v1469, %v1468
        %1471 = vrot.lane.b32.xlu0 %v1470, 104
        %v1472 = vpop.permute.xlu0 %1471
        %v1475 = vsel %vm1056, %v1465, 0
        %1477 = vmatprep.subr.bf16.mxu0 0
        %1478 = vmatpush1.bf16.msra.mxu0 0
        %1479 = vmatprep.subr.bf16.mxu0 0
        %1480 = vmatpush1.bf16.msra.mxu0 0
        %1481 = vmatprep.subr.bf16.mxu0 0
        %1482 = vmatpush1.bf16.msra.mxu0 0
        %1483 = vmatprep.subr.bf16.mxu0 0
        %1484 = vmatpush1.bf16.msra.mxu0 0
        %1485 = vmatprep.subr.bf16.mxu0 0
        %1486 = vmatpush1.bf16.msra.mxu0 0
        %1487 = vmatprep.subr.bf16.mxu0 0
        %1488 = vmatpush1.bf16.msra.mxu0 0
        %1489 = vmatprep.subr.bf16.mxu0 0
        %1490 = vmatpush1.bf16.msra.mxu0 0
        %1491 = vmatprep.subr.bf16.mxu0 0
        %1492 = vmatpush1.bf16.msra.mxu0 %v1472
        %1493 = vmatprep.subr.bf16.mxu0 0
        %1494 = vmatpush2.bf16.msra.mxu0 0
        %1495 = vmatprep.subr.bf16.mxu0 0
        %1496 = vmatpush2.bf16.msra.mxu0 0
        %1497 = vmatprep.subr.bf16.mxu0 0
        %1498 = vmatpush2.bf16.msra.mxu0 0
        %1499 = vmatprep.subr.bf16.mxu0 0
        %1500 = vmatpush2.bf16.msra.mxu0 0
        %1501 = vmatprep.subr.bf16.mxu0 0
        %1502 = vmatpush2.bf16.msra.mxu0 0
        %1503 = vmatprep.subr.bf16.mxu0 0
        %1504 = vmatpush2.bf16.msra.mxu0 0
        %1505 = vmatprep.subr.bf16.mxu0 0
        %1506 = vmatpush2.bf16.msra.mxu0 0
        %1507 = vmatprep.subr.bf16.mxu0 0
        %1508 = vmatpush2.bf16.msra.mxu0 0
        %1509 = vmatprep.mubr.bf16.mxu0 0
        %1510 = vmatmul.mubr.bf16.gmra.mxu0 %v1475
        %v1511 = vpop.f32.mrf.mxu0
        %v1512 = vadd.f32 0.0, %v1511
        %v1513 = vpop.f32.mrf.mxu0
        %v1514 = vpop.f32.mrf.mxu0
        %v1515 = vpop.f32.mrf.mxu0
        %1516 = vdwg.mxu0
        %v1517 = vpack.c.bf16 %v1512, %v1512
        %v1519 = vunpack.c.l.b16 %v1517
        %v1520 = vpack.c.b16 %v1519, %v1519
        %1521 = vrot.lane.b32.xlu0 %v1520, 24
        %v1522 = vpop.permute.xlu0 %1521
        %vm1524 = vcmask 257216
        %1525 = vst.msk [vmem:[#allocation5] sm:$0xf] %vm1524, %v1522
        %v1526 = vld [vmem:[#allocation5] sm:$0xf]
        %v1527 = vld [vmem:[%s11] sm:$0xf]
        %v1528 = vld [vmem:[%s11 + $0x4] sm:$0xf]
        %v1529 = vld [vmem:[%s11 + $0x8] sm:$0xf]
        %v1530 = vld [vmem:[%s11 + $0xc] sm:$0xf]
        %v1535 = vunpack.c.l.b16 %v1527
        %v1536 = vunpack.c.l.b16 %v1528
        %v1537 = vunpack.c.l.b16 %v1529
        %v1538 = vunpack.c.l.b16 %v1530
        %v1539 = vpack.c.b16 %v1536, %v1535
        %v1540 = vpack.c.b16 %v1538, %v1537
        %v1544 = vsel %vm883, %v1526, 0
        %1546 = vmatprep.subr.bf16.mxu0 0
        %1547 = vmatpush1.bf16.msra.mxu0 0
        %1548 = vmatprep.subr.bf16.mxu0 0
        %1549 = vmatpush1.bf16.msra.mxu0 0
        %1550 = vmatprep.subr.bf16.mxu0 0
        %1551 = vmatpush1.bf16.msra.mxu0 0
        %1552 = vmatprep.subr.bf16.mxu0 0
        %1553 = vmatpush1.bf16.msra.mxu0 0
        %1554 = vmatprep.subr.bf16.mxu0 0
        %1555 = vmatpush1.bf16.msra.mxu0 0
        %1556 = vmatprep.subr.bf16.mxu0 0
        %1557 = vmatpush1.bf16.msra.mxu0 0
        %1558 = vmatprep.subr.bf16.mxu0 0
        %1559 = vmatpush1.bf16.msra.mxu0 %v1540
        %1560 = vmatprep.subr.bf16.mxu0 0
        %1561 = vmatpush1.bf16.msra.mxu0 %v1539
        %1562 = vmatprep.subr.bf16.mxu0 0
        %1563 = vmatpush2.bf16.msra.mxu0 0
        %1564 = vmatprep.subr.bf16.mxu0 0
        %1565 = vmatpush2.bf16.msra.mxu0 0
        %1566 = vmatprep.subr.bf16.mxu0 0
        %1567 = vmatpush2.bf16.msra.mxu0 0
        %1568 = vmatprep.subr.bf16.mxu0 0
        %1569 = vmatpush2.bf16.msra.mxu0 0
        %1570 = vmatprep.subr.bf16.mxu0 0
        %1571 = vmatpush2.bf16.msra.mxu0 0
        %1572 = vmatprep.subr.bf16.mxu0 0
        %1573 = vmatpush2.bf16.msra.mxu0 0
        %1574 = vmatprep.subr.bf16.mxu0 0
        %1575 = vmatpush2.bf16.msra.mxu0 0
        %1576 = vmatprep.subr.bf16.mxu0 0
        %1577 = vmatpush2.bf16.msra.mxu0 0
        %1578 = vmatprep.mubr.bf16.mxu0 0
        %1579 = vmatmul.mubr.bf16.gmra.mxu0 %v1544
        %v1580 = vpop.f32.mrf.mxu0
        %v1581 = vadd.f32 0.0, %v1580
        %v1582 = vpop.f32.mrf.mxu0
        %v1583 = vpop.f32.mrf.mxu0
        %v1584 = vpop.f32.mrf.mxu0
        %1585 = vdwg.mxu0
        %v1586 = vadd.f32 %v882, %v1581
        %v1587 = vld [vmem:[%s12] sm:$0x1]
        %v1589 = vlaneseq
        %v1590 = vshrl.u32 %v1589, 7
        %v1591 = vsub.s32 0, %v1590
        %v1592 = vrot.slane %v1587, %v1591
        %v1594 = vadd.f32 %v1586, %v1592
        %v1595 = vld [vmem:[%s13] sm:$0x1]
        %v1596 = vld [vmem:[%s14] sm:$0x1]
        %v1597 = vsel %vm883, %v1594, 0.0
        %1598 = vadd.xlane.f32.xlu0 %v1597
        %v1599 = vpop.xlane.xlu0 %1598
        %v1600 = vmul.f32 %v1599, %v887
        %v1601 = vsub.f32 %v1594, %v1600
        %v1602 = vmul.f32 %v1601, %v1601
        %v1603 = vsel %vm883, %v1602, 0.0
        %1604 = vadd.xlane.f32.xlu0 %v1603
        %v1605 = vpop.xlane.xlu0 %1604
        %v1606 = vmul.f32 %v1605, 0.032258064
        %v1607 = vrsqrt.pop %v1606
        %v1608 = vmul.f32 %v1606, %v1607
        %vm1609 = vcmp.eq.f32.partialorder %v1606, inf
        %v1610 = vsel %vm1609, %v1606, %v1608
        %vm1611 = vcmp.eq.f32.partialorder %v1606, 0.0
        %v1612 = vand.u32 %v1606, 2147483648
        %v1613 = vsel %vm1611, %v1612, %v1610
        %v1614 = vadd.f32 %v1613, 1e-06
        %v1615 = vrcp.pop %v1614
        %v1617 = vlaneseq
        %v1618 = vshrl.u32 %v1617, 7
        %v1619 = vsub.s32 0, %v1618
        %v1620 = vrot.slane %v1595, %v1619
        %v1622 = vmul.f32 %v1620, %v1601
        %v1623 = vmul.f32 %v1622, %v1615
        %v1625 = vlaneseq
        %v1626 = vshrl.u32 %v1625, 7
        %v1627 = vsub.s32 0, %v1626
        %v1628 = vrot.slane %v1596, %v1627
        %v1630 = vadd.f32 %v1623, %v1628
        %v1631 = vpack.c.bf16 %v1630, %v1630
        %v1632 = vld [vmem:[%s15] sm:$0xf]
        %v1633 = vld [vmem:[%s15 + $0x4] sm:$0xf]
        %v1634 = vld [vmem:[%s15 + $0x8] sm:$0xf]
        %v1635 = vld [vmem:[%s15 + $0xc] sm:$0xf]
        %v1636 = vld [vmem:[%s16] sm:$0x1]
        %v1638 = vlaneseq
        %v1639 = vshrl.u32 %v1638, 7
        %v1640 = vsub.s32 0, %v1639
        %v1641 = vrot.slane %v1636, %v1640
        %v1647 = vunpack.c.l.b16 %v1632
        %v1648 = vunpack.c.l.b16 %v1633
        %v1649 = vunpack.c.l.b16 %v1634
        %v1650 = vunpack.c.l.b16 %v1635
        %v1651 = vpack.c.b16 %v1648, %v1647
        %v1652 = vpack.c.b16 %v1650, %v1649
        %v1656 = vsel %vm883, %v1631, 0
        %1658 = vmatprep.subr.bf16.mxu0 0
        %1659 = vmatpush1.bf16.msra.mxu0 0
        %1660 = vmatprep.subr.bf16.mxu0 0
        %1661 = vmatpush1.bf16.msra.mxu0 0
        %1662 = vmatprep.subr.bf16.mxu0 0
        %1663 = vmatpush1.bf16.msra.mxu0 0
        %1664 = vmatprep.subr.bf16.mxu0 0
        %1665 = vmatpush1.bf16.msra.mxu0 0
        %1666 = vmatprep.subr.bf16.mxu0 0
        %1667 = vmatpush1.bf16.msra.mxu0 0
        %1668 = vmatprep.subr.bf16.mxu0 0
        %1669 = vmatpush1.bf16.msra.mxu0 0
        %1670 = vmatprep.subr.bf16.mxu0 0
        %1671 = vmatpush1.bf16.msra.mxu0 %v1652
        %1672 = vmatprep.subr.bf16.mxu0 0
        %1673 = vmatpush1.bf16.msra.mxu0 %v1651
        %1674 = vmatprep.subr.bf16.mxu0 0
        %1675 = vmatpush2.bf16.msra.mxu0 0
        %1676 = vmatprep.subr.bf16.mxu0 0
        %1677 = vmatpush2.bf16.msra.mxu0 0
        %1678 = vmatprep.subr.bf16.mxu0 0
        %1679 = vmatpush2.bf16.msra.mxu0 0
        %1680 = vmatprep.subr.bf16.mxu0 0
        %1681 = vmatpush2.bf16.msra.mxu0 0
        %1682 = vmatprep.subr.bf16.mxu0 0
        %1683 = vmatpush2.bf16.msra.mxu0 0
        %1684 = vmatprep.subr.bf16.mxu0 0
        %1685 = vmatpush2.bf16.msra.mxu0 0
        %1686 = vmatprep.subr.bf16.mxu0 0
        %1687 = vmatpush2.bf16.msra.mxu0 0
        %1688 = vmatprep.subr.bf16.mxu0 0
        %1689 = vmatpush2.bf16.msra.mxu0 0
        %1690 = vmatprep.mubr.bf16.mxu0 0
        %1691 = vmatmul.mubr.bf16.gmra.mxu0 %v1656
        %v1692 = vpop.f32.mrf.mxu0
        %v1693 = vadd.f32 %v1641, %v1692
        %v1694 = vpop.f32.mrf.mxu0
        %v1695 = vpop.f32.mrf.mxu0
        %v1696 = vpop.f32.mrf.mxu0
        %1697 = vdwg.mxu0
        %v1698 = vmax.f32 %v1693, 0.0
        %v1699 = vpack.c.bf16 %v1698, %v1698
        %v1700 = vld [vmem:[%s17] sm:$0xf]
        %v1701 = vld [vmem:[%s17 + $0x4] sm:$0xf]
        %v1702 = vld [vmem:[%s17 + $0x8] sm:$0xf]
        %v1703 = vld [vmem:[%s17 + $0xc] sm:$0xf]
        %v1704 = vld [vmem:[%s17 + $0x10] sm:$0xf]
        %v1705 = vld [vmem:[%s17 + $0x14] sm:$0xf]
        %v1706 = vld [vmem:[%s17 + $0x18] sm:$0xf]
        %v1707 = vld [vmem:[%s17 + $0x1c] sm:$0xf]
        %v1708 = vld [vmem:[%s18] sm:$0x1]
        %v1710 = vlaneseq
        %v1711 = vshrl.u32 %v1710, 7
        %v1712 = vsub.s32 0, %v1711
        %v1713 = vrot.slane %v1708, %v1712
        %v1723 = vunpack.c.l.b16 %v1700
        %v1724 = vunpack.c.l.b16 %v1701
        %v1725 = vunpack.c.l.b16 %v1702
        %v1726 = vunpack.c.l.b16 %v1703
        %v1727 = vunpack.c.l.b16 %v1704
        %v1728 = vunpack.c.l.b16 %v1705
        %v1729 = vunpack.c.l.b16 %v1706
        %v1730 = vunpack.c.l.b16 %v1707
        %v1731 = vpack.c.b16 %v1724, %v1723
        %v1732 = vpack.c.b16 %v1726, %v1725
        %v1733 = vpack.c.b16 %v1728, %v1727
        %v1734 = vpack.c.b16 %v1730, %v1729
        %vm1739 = vcmask 523264
        %v1741 = vsel %vm1739, %v1699, 0
        %1743 = vmatprep.subr.bf16.mxu0 0
        %1744 = vmatpush1.bf16.msra.mxu0 0
        %1745 = vmatprep.subr.bf16.mxu0 0
        %1746 = vmatpush1.bf16.msra.mxu0 0
        %1747 = vmatprep.subr.bf16.mxu0 0
        %1748 = vmatpush1.bf16.msra.mxu0 0
        %1749 = vmatprep.subr.bf16.mxu0 0
        %1750 = vmatpush1.bf16.msra.mxu0 0
        %1751 = vmatprep.subr.bf16.mxu0 0
        %1752 = vmatpush1.bf16.msra.mxu0 %v1734
        %1753 = vmatprep.subr.bf16.mxu0 0
        %1754 = vmatpush1.bf16.msra.mxu0 %v1733
        %1755 = vmatprep.subr.bf16.mxu0 0
        %1756 = vmatpush1.bf16.msra.mxu0 %v1732
        %1757 = vmatprep.subr.bf16.mxu0 0
        %1758 = vmatpush1.bf16.msra.mxu0 %v1731
        %1759 = vmatprep.subr.bf16.mxu0 0
        %1760 = vmatpush2.bf16.msra.mxu0 0
        %1761 = vmatprep.subr.bf16.mxu0 0
        %1762 = vmatpush2.bf16.msra.mxu0 0
        %1763 = vmatprep.subr.bf16.mxu0 0
        %1764 = vmatpush2.bf16.msra.mxu0 0
        %1765 = vmatprep.subr.bf16.mxu0 0
        %1766 = vmatpush2.bf16.msra.mxu0 0
        %1767 = vmatprep.subr.bf16.mxu0 0
        %1768 = vmatpush2.bf16.msra.mxu0 0
        %1769 = vmatprep.subr.bf16.mxu0 0
        %1770 = vmatpush2.bf16.msra.mxu0 0
        %1771 = vmatprep.subr.bf16.mxu0 0
        %1772 = vmatpush2.bf16.msra.mxu0 0
        %1773 = vmatprep.subr.bf16.mxu0 0
        %1774 = vmatpush2.bf16.msra.mxu0 0
        %1775 = vmatprep.mubr.bf16.mxu0 0
        %1776 = vmatmul.mubr.bf16.gmra.mxu0 %v1741
        %v1777 = vpop.f32.mrf.mxu0
        %v1778 = vadd.f32 %v1713, %v1777
        %v1779 = vpop.f32.mrf.mxu0
        %v1780 = vpop.f32.mrf.mxu0
        %v1781 = vpop.f32.mrf.mxu0
        %1782 = vdwg.mxu0
        %v1783 = vadd.f32 %v1594, %v1778
        %1784 = vst.msk [vmem:[%s643] sm:$0xff] %vm883, %v1783
        %s1785 = sand.u32 %s471, 1
        %s1786 = scalar_lea.sflag [#allocation7], %s1785
        %s1787 = sand.u32 %s471, 1
        %s1788 = smul.addr %s1787, 8
        %s1789 = scalar_lea.vmem [#allocation6], %s1788
        // Predicated region
        $region101: #{_transformer_block_jit.1} parent=95 // pred_check
          %p1790 = pneg %p481
        $region102: #{_transformer_block_jit.1} parent=95 // pred_check_branch
          %1792 = sbr.rel (%p1790) target = $region104
        $region103: #{_transformer_block_jit.1} parent=95 // pred_region
          %s1794 = ssub.s32 128, 128
          %1795 = vsyncadd %s1786, %s1794
          %s1796 = smul.addr %s37, 2
          %s1797 = sadd.s32 %s38, %s1796
          %s1798 = smul.addr %s1797, 128
          %s1799 = scalar_lea.hbm %s19, %s1798
          %s1801 = sshll.u32 %s1789, 4
          %s1802 = int_to_ptr.vmem [resolvable:$true] %s1801
          %1804 = dma.vmem_to_hbm [thread:$0]  %s1802, 128, %s1799, %s1786
        $region104: #{_transformer_block_jit.1} parent=95 // pred_fallthru
          _
      $region96: #{_transformer_block_jit.1} parent=5 // pred_fallthru
        _
      %p1805 = scmp.le.s32.totalorder 2, %s28
      // Predicated region
      $region105: #{_transformer_block_jit.1} parent=5 // pred_check
        %p1806 = pneg %p1805
      $region106: #{_transformer_block_jit.1} parent=5 // pred_check_branch
        %1808 = sbr.rel (%p1806) target = $region108
      $region107: #{_transformer_block_jit.1} parent=5 // pred_region
        %s1809 = ssub.s32 %s28, 2
        // Predicated region
        $region109: #{_transformer_block_jit.1} parent=107 // pred_check
          %p1810 = pneg %p487
        $region110: #{_transformer_block_jit.1} parent=107 // pred_check_branch
          %1812 = sbr.rel (%p1810) target = $region112
        $region111: #{_transformer_block_jit.1} parent=107 // pred_region
          %s1813 = sand.u32 %s472, 1
          %s1814 = scalar_lea.sflag [#allocation7], %s1813
          %s1815 = sand.u32 %s472, 1
          %s1816 = smul.addr %s1815, 8
          %s1817 = scalar_lea.vmem [#allocation6], %s1816
          %1818 = dma.done %s1814, 128
        $region112: #{_transformer_block_jit.1} parent=107 // pred_fallthru
          _
      $region108: #{_transformer_block_jit.1} parent=5 // pred_fallthru
        _
    $region6: #{_transformer_block_jit.1} parent=1 // loop_footer
      %s32 = sadd.s32 1, %s28
    $region7: #{_transformer_block_jit.1} parent=1 // loop_footer_branch
      %27 = sbr.rel target = $region3
    $region8: #{_transformer_block_jit.1} parent=1 // loop_exit
      _
    %1819 = vsyncpa [#allocation7], 1
    %s1820 = scalar_lea.sflag [#allocation7], 1
    %1821 = vsyncpa %s1820, 1

</llo_original>
